<compile_context>
chip_gen: v6e
topology: v6e:2x2x1
jax: 0.10.0
libtpu: 0.0.40
codegen_flags: <defaults>
</compile_context>

<pallas_src>
import math
import functools

import numpy as np
import jax
import jax.numpy as jnp
from jax import lax
from jax.experimental import pallas as pl
from jax.experimental.pallas import tpu as pltpu

EPS = 1e-5  # PyTorch InstanceNorm default eps


def _dot(a, b, mm_dtype):
    """a @ b (2-D) on the MXU, f32 accumulation."""
    return lax.dot_general(
        a.astype(mm_dtype), b.astype(mm_dtype),
        (((1,), (0,)), ((), ())),
        preferred_element_type=jnp.float32)


def _dot_tb(a, b, mm_dtype):
    """a @ b.T without materializing a transpose: contract both minor dims."""
    return lax.dot_general(
        a.astype(mm_dtype), b.astype(mm_dtype),
        (((1,), (1,)), ((), ())),
        preferred_element_type=jnp.float32)


def _instance_norm(x, selT, selm, gamma, beta):
    """Per-segment (per-batch), per-channel InstanceNorm (biased var) in f32.

    x: (Bt*L, C) f32.  selm (Bt, Bt*L) has entries 1/L (segment mean operator),
    selT (Bt*L, Bt) broadcasts per-segment statistics back to the rows.
    """
    mu = _dot(selT, _dot(selm, x, jnp.float32), jnp.float32)
    d = x - mu
    var = _dot(selT, _dot(selm, d * d, jnp.float32), jnp.float32)
    return d * lax.rsqrt(var + EPS) * gamma + beta


def _simple_attention_kernel(
    vis_ref,    # (Bt*L, Cip)  padded visual tokens, Bt batches stacked on rows
    lan_ref,    # (Bt*T, Ctp)  padded language tokens, row-major
    selT_ref,   # (Bt*L, Bt)   row -> segment one-hot (f32 constant)
    selm_ref,   # (Bt, Bt*L)   segment-mean operator, entries 1/L (f32 constant)
    w_vis_ref,  # (Cip, Dp)    vis_project weight^T
    w_lan_ref,  # (Ctp, Dp)    lan_project weight^T
    wq_ref,     # (Dp, Dp)     linear_q weight^T
    wk_ref,     # (Dp, Dp)     linear_k weight^T (shared by visual + language keys)
    wv_ref,     # (Dp, Dp)     linear_v weight^T (shared)
    w_out_ref,  # (Dp, Cip)    output_layer weight^T
    vecD_ref,   # (4, Dp)      [b_vis ; ins_q gamma ; ins_q beta ; b_lan]
    vecC_ref,   # (3, Cip)     [b_out ; ins_w gamma ; ins_w beta]
    out_ref,    # (Bt*L, Cip)
    q_scr, k_scr, v_scr,       # (Bt*L, Dp) VMEM, matmul dtype
    kl_scr, vl_scr,            # (Bt*T, Dp) VMEM, matmul dtype
    att_scr,                   # (Bt*L, Dp) VMEM, matmul dtype
    *, Bt, L, T, D_orig, mm_dtype,
):
    b_vis = vecD_ref[0:1, :]
    g_q   = vecD_ref[1:2, :]
    be_q  = vecD_ref[2:3, :]
    b_lan = vecD_ref[3:4, :]
    b_out = vecC_ref[0:1, :]
    g_w   = vecC_ref[1:2, :]
    be_w  = vecC_ref[2:3, :]
    selT = selT_ref[...]
    selm = selm_ref[...]

    # --- vis_project (1x1 Conv2d) + ins_q for all Bt batches at once (f32 stats) ---
    vis_p = _dot(vis_ref[...], w_vis_ref[...], mm_dtype) + b_vis         # (Bt*L, Dp) f32
    xn = _instance_norm(vis_p, selT, selm, g_q, be_q)                    # (Bt*L, Dp) f32

    # --- visual Q/K/V, all batches at once; scale q (LxD) instead of the logits ---
    inv_sqrt_d = 1.0 / math.sqrt(D_orig)
    q_scr[...] = (_dot(xn, wq_ref[...], mm_dtype) * inv_sqrt_d).astype(q_scr.dtype)
    k_scr[...] = _dot(xn, wk_ref[...], mm_dtype).astype(k_scr.dtype)
    v_scr[...] = _dot(xn, wv_ref[...], mm_dtype).astype(v_scr.dtype)

    # --- lan_project (1x1 Conv1d) + language K/V, all batches in one big-M matmul ---
    lan_p = _dot(lan_ref[...], w_lan_ref[...], mm_dtype) + b_lan         # (Bt*T, Dp) f32
    kl_scr[...] = _dot(lan_p, wk_ref[...], mm_dtype).astype(kl_scr.dtype)
    vl_scr[...] = _dot(lan_p, wv_ref[...], mm_dtype).astype(vl_scr.dtype)

    # --- per-batch attention (queries = visual tokens only) --------------------
    # fori_loop + VMEM scratch slices bound vreg live ranges (no Python unroll).
    def body(b, carry):
        sv = b * L
        sl = b * T
        if L % 8 == 0:
            sv = pl.multiple_of(sv, 8)
        if T % 8 == 0:
            sl = pl.multiple_of(sl, 8)
        rv = pl.ds(sv, L)
        rl = pl.ds(sl, T)

        q_b = q_scr[rv, :]                                               # (L, Dp)
        # two-block logits: [visual | language] keys -- no concat, no transpose
        logit_v = _dot_tb(q_b, k_scr[rv, :], mm_dtype)                   # (L, L)
        logit_l = _dot_tb(q_b, kl_scr[rl, :], mm_dtype)                  # (L, T)

        m = jnp.maximum(jnp.max(logit_v, axis=-1, keepdims=True),
                        jnp.max(logit_l, axis=-1, keepdims=True))
        p_v = jnp.exp(logit_v - m)
        p_l = jnp.exp(logit_l - m)
        denom = (jnp.sum(p_v, axis=-1, keepdims=True)
                 + jnp.sum(p_l, axis=-1, keepdims=True))

        att_b = (_dot(p_v, v_scr[rv, :], mm_dtype)
                 + _dot(p_l, vl_scr[rl, :], mm_dtype))                   # (L, Dp) f32
        # EXACT normalization of the (L, Dp) result (not the (L, L+T) probs).
        att_scr[rv, :] = (att_b / denom).astype(att_scr.dtype)
        return carry

    lax.fori_loop(0, Bt, body, 0)

    # --- output 1x1 conv for all batches at once, then ins_w (f32 stats) ---
    out = _dot(att_scr[...], w_out_ref[...], mm_dtype) + b_out           # (Bt*L, Cip)
    out_ref[...] = _instance_norm(out, selT, selm, g_w, be_w).astype(out_ref.dtype)


# ----------------------------------------------------------------------------- 
# Wrapper helpers
# -----------------------------------------------------------------------------
def _round_up(x, m):
    return ((x + m - 1) // m) * m


def _pad2d(a, r, c):
    return jnp.pad(a, ((0, r - a.shape[0]), (0, c - a.shape[1])))


def _pad1d(v, n):
    return jnp.pad(v, (0, n - v.shape[0]))


def _vmem_capacity_bytes():
    try:
        return int(pltpu.get_tpu_info().vmem_capacity_bytes)
    except Exception:
        return 64 * 1024 * 1024     # conservative fallback: v7x has 64 MiB / TC


def _vmem_estimate_bytes(Bt, L, T, Cip, Ctp, Dp, mm_bytes):
    stream_in = 2 * (Bt * L * Cip + Bt * T * Ctp) * mm_bytes     # double-buffered inputs
    stream_out = 2 * Bt * L * Cip * 4                            # double-buffered f32 output
    const = ((Cip + Ctp + 3 * Dp) * Dp + Dp * Cip) * mm_bytes \
            + (4 * Dp + 3 * Cip + 2 * Bt * Bt * L) * 4           # single-buffered constants
    scratch = (4 * Bt * L + 2 * Bt * T) * Dp * mm_bytes          # q/k/v/att + language k/v
    interm = 4 * Bt * L * Dp * 4 + 3 * Bt * L * Cip * 4 + 4 * L * (L + T) * 4
    return stream_in + stream_out + const + scratch + interm


def _pick_batch_tile(B, L, T, Cip, Ctp, Dp, mm_bytes, vmem_cap):
    """Largest batch tile whose blocks stay 8-aligned, fits the VMEM budget and
    keeps grid >= 2 (preferably even) so the 'parallel' batch axis fills both
    v7x TensorCores / the megacore."""
    if B == 1:
        return 1
    if L % 8 != 0 or T % 8 != 0:
        # TODO(synk): non 8-aligned L/T fall back to one full-batch grid step.
        return B
    budget = int(0.6 * vmem_cap)

    def fits(bt):
        return _vmem_estimate_bytes(bt, L, T, Cip, Ctp, Dp, mm_bytes) <= budget

    divs = [bt for bt in range(B // 2, 0, -1) if B % bt == 0 and fits(bt)]
    for bt in divs:                       # prefer an even grid (2 TensorCores)
        if (B // bt) % 2 == 0:
            return bt
    return divs[0] if divs else 1


def simple_attention_pallas(vis_feat, lan_feat, H, W, params, *,
                            batch_tile=None, matmul_dtype=jnp.float32):
    B, L, Ci = vis_feat.shape
    Bl, Ct, T = lan_feat.shape
    D = params["wq"].shape[0]
    assert L == H * W and Bl == B

    mm = matmul_dtype
    mm_bytes = np.dtype(matmul_dtype).itemsize
    f32 = jnp.float32

    # Lane-dense padded model dims (zero padding is exact through the per-channel
    # InstanceNorms: padded channels stay identically zero end to end).
    Dp = _round_up(D, 128)
    Cip = _round_up(Ci, 128)
    Ctp = _round_up(Ct, 128)

    vmem_cap = _vmem_capacity_bytes()
    if batch_tile is None:
        Bt = _pick_batch_tile(B, L, T, Cip, Ctp, Dp, mm_bytes, vmem_cap)
    else:
        Bt = int(batch_tile)
        if B % Bt != 0:
            raise ValueError(f"batch_tile={Bt} must divide B={B}")
        if Bt != B and ((Bt * L) % 8 != 0 or (Bt * T) % 8 != 0):
            raise ValueError(
                f"batch_tile={Bt}: Bt*L={Bt * L} and Bt*T={Bt * T} must be "
                "multiples of 8 (TPU sublane rule) unless the tile covers the "
                "full batch")
    grid = (B // Bt,)

    # --- weights: transpose once, zero-pad to lane-dense shapes, cast to mm ---
    w_vis_t = _pad2d(params["w_vis"].T, Cip, Dp).astype(mm)    # (Ci,D)  -> (Cip,Dp)
    w_lan_t = _pad2d(params["w_lan"].T, Ctp, Dp).astype(mm)    # (Ct,D)  -> (Ctp,Dp)
    wq_t = _pad2d(params["wq"].T, Dp, Dp).astype(mm)
    wk_t = _pad2d(params["wk"].T, Dp, Dp).astype(mm)
    wv_t = _pad2d(params["wv"].T, Dp, Dp).astype(mm)
    w_out_t = _pad2d(params["w_out"].T, Dp, Cip).astype(mm)    # (D,Ci)  -> (Dp,Cip)
    vecD = jnp.stack([_pad1d(params["b_vis"], Dp), _pad1d(params["g_q"], Dp),
                      _pad1d(params["be_q"], Dp), _pad1d(params["b_lan"], Dp)]
                     ).astype(f32)                              # (4, Dp)
    vecC = jnp.stack([_pad1d(params["b_out"], Cip), _pad1d(params["g_w"], Cip),
                      _pad1d(params["be_w"], Cip)]).astype(f32)  # (3, Cip)

    # InstanceNorm segment selectors (constants, shared by ins_q and ins_w).
    seg = jnp.arange(Bt * L, dtype=jnp.int32) // L
    selT = (seg[:, None] == jnp.arange(Bt, dtype=jnp.int32)[None, :]).astype(f32)  # (Bt*L, Bt)
    selm = selT.T * (1.0 / L)                                                      # (Bt, Bt*L)

    # --- activations: lane-dense row slabs.  Note: in the bf16 path the inputs
    # themselves are cast to bf16 (extra ~1e-2 drift); stats stay f32. ---
    vis2d = _pad2d(vis_feat.reshape(B * L, Ci), B * L, Cip).astype(mm)
    lan2d = _pad2d(jnp.transpose(lan_feat, (0, 2, 1)).reshape(B * T, Ct),
                   B * T, Ctp).astype(mm)   # tiny wrapper transpose -> row-major tokens

    const_args = (selT, selm, w_vis_t, w_lan_t, wq_t, wk_t, wv_t, w_out_t, vecD, vecC)

    in_specs = [
        pl.BlockSpec((Bt * L, Cip), lambda i: (i, 0)),
        pl.BlockSpec((Bt * T, Ctp), lambda i: (i, 0)),
    ] + [
        # full-array constant blocks: resident across the grid -> single buffer
        pl.BlockSpec(c.shape, lambda i: (0, 0), pipeline_mode=pl.Buffered(1))
        for c in const_args
    ]
    out_specs = pl.BlockSpec((Bt * L, Cip), lambda i: (i, 0))

    kernel = functools.partial(_simple_attention_kernel,
                               Bt=Bt, L=L, T=T, D_orig=D, mm_dtype=mm)

    est = _vmem_estimate_bytes(Bt, L, T, Cip, Ctp, Dp, mm_bytes)
    vmem_limit = int(max(min(vmem_cap - (4 << 20), max(32 << 20, 2 * est)), est))

    flops = int(2 * B * (L * Cip * Dp + T * Ctp * Dp
                         + (3 * L + 2 * T) * Dp * Dp
                         + 2 * L * (L + T) * Dp
                         + L * Dp * Cip))
    transcendentals = int(B * L * (L + T))
    bytes_accessed = int(vis2d.size * mm_bytes + lan2d.size * mm_bytes
                         + sum(int(c.size) * c.dtype.itemsize for c in const_args)
                         + B * L * Cip * 4)

    out2d = pl.pallas_call(
        kernel,
        out_shape=jax.ShapeDtypeStruct((B * L, Cip), jnp.float32),
        grid=grid,
        in_specs=in_specs,
        out_specs=out_specs,
        scratch_shapes=[
            pltpu.VMEM((Bt * L, Dp), mm),   # q (visual)
            pltpu.VMEM((Bt * L, Dp), mm),   # k (visual)
            pltpu.VMEM((Bt * L, Dp), mm),   # v (visual)
            pltpu.VMEM((Bt * T, Dp), mm),   # k (language)
            pltpu.VMEM((Bt * T, Dp), mm),   # v (language)
            pltpu.VMEM((Bt * L, Dp), mm),   # attention output staging
        ],
        compiler_params=pltpu.CompilerParams(
            dimension_semantics=("parallel",),   # shard batch tiles across TCs
            vmem_limit_bytes=vmem_limit,
        ),
        cost_estimate=pl.CostEstimate(flops=flops,
                                      transcendentals=transcendentals,
                                      bytes_accessed=bytes_accessed),
    )(vis2d, lan2d, *const_args)

    return out2d[:, :Ci].reshape(B, L, Ci)


# -----------------------------------------------------------------------------
# Pure-JAX reference mirroring the PyTorch forward semantics.
# -----------------------------------------------------------------------------
def simple_attention_ref(vis_feat, lan_feat, H, W, params):
    B, L, Ci = vis_feat.shape
    _, Ct, T = lan_feat.shape
    D = params["wq"].shape[0]

    vis_p = jnp.einsum("blc,dc->bld", vis_feat, params["w_vis"]) + params["b_vis"]
    mu = jnp.mean(vis_p, axis=1, keepdims=True)
    var = jnp.mean((vis_p - mu) ** 2, axis=1, keepdims=True)
    vis_n = (vis_p - mu) / jnp.sqrt(var + EPS) * params["g_q"] + params["be_q"]

    lan_t = jnp.transpose(lan_feat, (0, 2, 1))
    lan_p = jnp.einsum("btc,dc->btd", lan_t, params["w_lan"]) + params["b_lan"]

    x = jnp.concatenate([vis_n, lan_p], axis=1)
    q = x @ params["wq"].T
    k = x @ params["wk"].T
    v = x @ params["wv"].T
    dist = jax.nn.softmax(jnp.einsum("bnd,bmd->bnm", q, k) / math.sqrt(D), axis=-1)
    att = jnp.einsum("bnm,bmd->bnd", dist, v)

    out = jnp.einsum("bld,cd->blc", att[:, :L, :], params["w_out"]) + params["b_out"]
    mu2 = jnp.mean(out, axis=1, keepdims=True)
    var2 = jnp.mean((out - mu2) ** 2, axis=1, keepdims=True)
    return (out - mu2) / jnp.sqrt(var2 + EPS) * params["g_w"] + params["be_w"]


if __name__ == "__main__":
    # Small shapes consistent with the module's forward.
    B, Ci, Ct, D, H, W, T = 2, 4, 6, 8, 4, 4, 8
    L = H * W

    key = jax.random.PRNGKey(0)
    ks = jax.random.split(key, 16)

    vis_feat = jax.random.normal(ks[0], (B, L, Ci), jnp.float32)   # (B, L, visual_channel)
    lan_feat = jax.random.normal(ks[1], (B, Ct, T), jnp.float32)   # (B, language_channel, T)

    params = dict(
        w_vis=0.3 * jax.random.normal(ks[2], (D, Ci), jnp.float32),    # Conv2d(Ci->D, 1x1)
        b_vis=0.1 * jax.random.normal(ks[3], (D,), jnp.float32),
        g_q=1.0 + 0.1 * jax.random.normal(ks[4], (D,), jnp.float32),   # InstanceNorm2d affine
        be_q=0.1 * jax.random.normal(ks[5], (D,), jnp.float32),
        w_lan=0.3 * jax.random.normal(ks[6], (D, Ct), jnp.float32),    # Conv1d(Ct->D, k=1)
        b_lan=0.1 * jax.random.normal(ks[7], (D,), jnp.float32),
        wq=0.3 * jax.random.normal(ks[8], (D, D), jnp.float32),        # Linear(D, D, bias=False)
        wk=0.3 * jax.random.normal(ks[9], (D, D), jnp.float32),
        wv=0.3 * jax.random.normal(ks[10], (D, D), jnp.float32),
        w_out=0.3 * jax.random.normal(ks[11], (Ci, D), jnp.float32),   # Conv2d(D->Ci, 1x1)
        b_out=0.1 * jax.random.normal(ks[12], (Ci,), jnp.float32),
        g_w=1.0 + 0.1 * jax.random.normal(ks[13], (Ci,), jnp.float32), # InstanceNorm2d affine
        be_w=0.1 * jax.random.normal(ks[14], (Ci,), jnp.float32),
    )

    # 1) f32, auto batch tile (Bt=1, grid=(2,)) -- strict check against f32 reference.
    out1 = jax.block_until_ready(simple_attention_pallas(vis_feat, lan_feat, H, W, params))
    ref1 = simple_attention_ref(vis_feat, lan_feat, H, W, params)
    assert out1.shape == (B, L, Ci)
    err1 = float(jnp.max(jnp.abs(out1 - ref1)))
    assert err1 < 5e-3, err1

    # 2) f32, batch-tiled path (Bt=2 batch elements per grid step) on a larger batch.
    vis2 = jnp.concatenate([vis_feat, 0.5 * vis_feat[::-1]], axis=0)   # (4, L, Ci)
    lan2 = jnp.concatenate([lan_feat, 0.5 * lan_feat[::-1]], axis=0)   # (4, Ct, T)
    out2 = jax.block_until_ready(
        simple_attention_pallas(vis2, lan2, H, W, params, batch_tile=2))
    ref2 = simple_attention_ref(vis2, lan2, H, W, params)
    assert out2.shape == (4, L, Ci)
    err2 = float(jnp.max(jnp.abs(out2 - ref2)))
    assert err2 < 5e-3, err2

    # 3) bf16 MXU operands (v5e/v6e/v7x feed), f32 statistics / accumulation.
    #    Coarse sanity bound only: bf16 operand rounding is amplified by two
    #    InstanceNorms at these tiny channel counts, so only loose agreement
    #    with the f32 reference is expected.
    out3 = jax.block_until_ready(
        simple_attention_pallas(vis2, lan2, H, W, params,
                                batch_tile=2, matmul_dtype=jnp.bfloat16))
    assert bool(jnp.all(jnp.isfinite(out3)))
    rel_l2 = float(jnp.linalg.norm(out3 - ref2) / (jnp.linalg.norm(ref2) + 1e-12))
    assert rel_l2 < 0.3, rel_l2

    print("KERNEL_OK")
</pallas_src>

<mosaic_0001>
module attributes {stable_mosaic.version = 11 : i64} {
  func.func @_simple_attention_kernel(%arg0: i32, %arg1: memref<16x128xf32, #tpu.memory_space<vmem>>, %arg2: memref<8x128xf32, #tpu.memory_space<vmem>>, %arg3: memref<16x1xf32, #tpu.memory_space<vmem>>, %arg4: memref<1x16xf32, #tpu.memory_space<vmem>>, %arg5: memref<128x128xf32, #tpu.memory_space<vmem>>, %arg6: memref<128x128xf32, #tpu.memory_space<vmem>>, %arg7: memref<128x128xf32, #tpu.memory_space<vmem>>, %arg8: memref<128x128xf32, #tpu.memory_space<vmem>>, %arg9: memref<128x128xf32, #tpu.memory_space<vmem>>, %arg10: memref<128x128xf32, #tpu.memory_space<vmem>>, %arg11: memref<4x128xf32, #tpu.memory_space<vmem>>, %arg12: memref<3x128xf32, #tpu.memory_space<vmem>>, %arg13: memref<16x128xf32, #tpu.memory_space<vmem>>, %arg14: memref<16x128xf32, #tpu.memory_space<vmem>>, %arg15: memref<16x128xf32, #tpu.memory_space<vmem>>, %arg16: memref<16x128xf32, #tpu.memory_space<vmem>>, %arg17: memref<8x128xf32, #tpu.memory_space<vmem>>, %arg18: memref<8x128xf32, #tpu.memory_space<vmem>>, %arg19: memref<16x128xf32, #tpu.memory_space<vmem>>) attributes {dimension_semantics = [#tpu.dimension_semantics<parallel>], iteration_bounds = array<i64: 2>, scalar_prefetch = 0 : i64, scratch_operands = 6 : i64, tpu.core_type = #tpu.core_type<tc>, window_params = [{transform_indices = @transform_0, window_bounds = array<i64: 16, 128>}, {transform_indices = @transform_1, window_bounds = array<i64: 8, 128>}, {pipeline_mode = #tpu.pipeline_mode<synchronous>, transform_indices = @transform_2, window_bounds = array<i64: 16, 1>}, {pipeline_mode = #tpu.pipeline_mode<synchronous>, transform_indices = @transform_3, window_bounds = array<i64: 1, 16>}, {pipeline_mode = #tpu.pipeline_mode<synchronous>, transform_indices = @transform_4, window_bounds = array<i64: 128, 128>}, {pipeline_mode = #tpu.pipeline_mode<synchronous>, transform_indices = @transform_5, window_bounds = array<i64: 128, 128>}, {pipeline_mode = #tpu.pipeline_mode<synchronous>, transform_indices = @transform_6, window_bounds = array<i64: 128, 128>}, {pipeline_mode = #tpu.pipeline_mode<synchronous>, transform_indices = @transform_7, window_bounds = array<i64: 128, 128>}, {pipeline_mode = #tpu.pipeline_mode<synchronous>, transform_indices = @transform_8, window_bounds = array<i64: 128, 128>}, {pipeline_mode = #tpu.pipeline_mode<synchronous>, transform_indices = @transform_9, window_bounds = array<i64: 128, 128>}, {pipeline_mode = #tpu.pipeline_mode<synchronous>, transform_indices = @transform_10, window_bounds = array<i64: 4, 128>}, {pipeline_mode = #tpu.pipeline_mode<synchronous>, transform_indices = @transform_11, window_bounds = array<i64: 3, 128>}, {transform_indices = @transform_12, window_bounds = array<i64: 16, 128>}]} {
    %c0 = arith.constant 0 : index
    %c0_0 = arith.constant 0 : index
    %0 = vector.load %arg11[%c0, %c0_0] : memref<4x128xf32, #tpu.memory_space<vmem>>, vector<1x128xf32>
    %c1 = arith.constant 1 : index
    %c0_1 = arith.constant 0 : index
    %1 = vector.load %arg11[%c1, %c0_1] : memref<4x128xf32, #tpu.memory_space<vmem>>, vector<1x128xf32>
    %c2 = arith.constant 2 : index
    %c0_2 = arith.constant 0 : index
    %2 = vector.load %arg11[%c2, %c0_2] : memref<4x128xf32, #tpu.memory_space<vmem>>, vector<1x128xf32>
    %c3 = arith.constant 3 : index
    %c0_3 = arith.constant 0 : index
    %3 = vector.load %arg11[%c3, %c0_3] : memref<4x128xf32, #tpu.memory_space<vmem>>, vector<1x128xf32>
    %c0_4 = arith.constant 0 : index
    %c0_5 = arith.constant 0 : index
    %4 = vector.load %arg12[%c0_4, %c0_5] : memref<3x128xf32, #tpu.memory_space<vmem>>, vector<1x128xf32>
    %c1_6 = arith.constant 1 : index
    %c0_7 = arith.constant 0 : index
    %5 = vector.load %arg12[%c1_6, %c0_7] : memref<3x128xf32, #tpu.memory_space<vmem>>, vector<1x128xf32>
    %c2_8 = arith.constant 2 : index
    %c0_9 = arith.constant 0 : index
    %6 = vector.load %arg12[%c2_8, %c0_9] : memref<3x128xf32, #tpu.memory_space<vmem>>, vector<1x128xf32>
    %c0_10 = arith.constant 0 : index
    %c0_11 = arith.constant 0 : index
    %7 = vector.load %arg3[%c0_10, %c0_11] : memref<16x1xf32, #tpu.memory_space<vmem>>, vector<16x1xf32>
    %c0_12 = arith.constant 0 : index
    %c0_13 = arith.constant 0 : index
    %8 = vector.load %arg4[%c0_12, %c0_13] : memref<1x16xf32, #tpu.memory_space<vmem>>, vector<1x16xf32>
    %c0_14 = arith.constant 0 : index
    %c0_15 = arith.constant 0 : index
    %9 = vector.load %arg1[%c0_14, %c0_15] : memref<16x128xf32, #tpu.memory_space<vmem>>, vector<16x128xf32>
    %c0_16 = arith.constant 0 : index
    %c0_17 = arith.constant 0 : index
    %10 = vector.load %arg5[%c0_16, %c0_17] : memref<128x128xf32, #tpu.memory_space<vmem>>, vector<128x128xf32>
    %cst = arith.constant dense<0.000000e+00> : vector<16x128xf32>
    %11 = tpu.matmul %9, %10, %cst {dimension_numbers = #tpu.dot_dimension_numbers<[1], [0], [0], [1], [0, 0, 1, 1], [], []>} : vector<16x128xf32>, vector<128x128xf32>, vector<16x128xf32> -> vector<16x128xf32>
    %12 = vector.broadcast %0 : vector<1x128xf32> to vector<16x128xf32>
    %13 = arith.addf %11, %12 : vector<16x128xf32>
    %cst_18 = arith.constant dense<0.000000e+00> : vector<1x128xf32>
    %14 = tpu.matmul %8, %13, %cst_18 {dimension_numbers = #tpu.dot_dimension_numbers<[1], [0], [0], [1], [0, 0, 1, 1], [], []>} : vector<1x16xf32>, vector<16x128xf32>, vector<1x128xf32> -> vector<1x128xf32>
    %cst_19 = arith.constant dense<0.000000e+00> : vector<16x128xf32>
    %15 = tpu.matmul %7, %14, %cst_19 {dimension_numbers = #tpu.dot_dimension_numbers<[1], [0], [0], [1], [0, 0, 1, 1], [], []>} : vector<16x1xf32>, vector<1x128xf32>, vector<16x128xf32> -> vector<16x128xf32>
    %16 = arith.subf %13, %15 : vector<16x128xf32>
    %17 = arith.mulf %16, %16 : vector<16x128xf32>
    %cst_20 = arith.constant dense<0.000000e+00> : vector<1x128xf32>
    %18 = tpu.matmul %8, %17, %cst_20 {dimension_numbers = #tpu.dot_dimension_numbers<[1], [0], [0], [1], [0, 0, 1, 1], [], []>} : vector<1x16xf32>, vector<16x128xf32>, vector<1x128xf32> -> vector<1x128xf32>
    %cst_21 = arith.constant dense<0.000000e+00> : vector<16x128xf32>
    %19 = tpu.matmul %7, %18, %cst_21 {dimension_numbers = #tpu.dot_dimension_numbers<[1], [0], [0], [1], [0, 0, 1, 1], [], []>} : vector<16x1xf32>, vector<1x128xf32>, vector<16x128xf32> -> vector<16x128xf32>
    %cst_22 = arith.constant 9.99999974E-6 : f32
    %20 = vector.broadcast %cst_22 : f32 to vector<16x128xf32>
    %21 = arith.addf %19, %20 : vector<16x128xf32>
    %22 = math.rsqrt %21 : vector<16x128xf32>
    %23 = arith.mulf %16, %22 : vector<16x128xf32>
    %24 = vector.broadcast %1 : vector<1x128xf32> to vector<16x128xf32>
    %25 = arith.mulf %23, %24 : vector<16x128xf32>
    %26 = vector.broadcast %2 : vector<1x128xf32> to vector<16x128xf32>
    %27 = arith.addf %25, %26 : vector<16x128xf32>
    %c0_23 = arith.constant 0 : index
    %c0_24 = arith.constant 0 : index
    %28 = vector.load %arg7[%c0_23, %c0_24] : memref<128x128xf32, #tpu.memory_space<vmem>>, vector<128x128xf32>
    %cst_25 = arith.constant dense<0.000000e+00> : vector<16x128xf32>
    %29 = tpu.matmul %27, %28, %cst_25 {dimension_numbers = #tpu.dot_dimension_numbers<[1], [0], [0], [1], [0, 0, 1, 1], [], []>} : vector<16x128xf32>, vector<128x128xf32>, vector<16x128xf32> -> vector<16x128xf32>
    %cst_26 = arith.constant 0.353553385 : f32
    %30 = vector.broadcast %cst_26 : f32 to vector<16x128xf32>
    %31 = arith.mulf %29, %30 : vector<16x128xf32>
    %c0_27 = arith.constant 0 : index
    %c0_28 = arith.constant 0 : index
    %32 = vector.load %arg14[%c0_27, %c0_28] : memref<16x128xf32, #tpu.memory_space<vmem>>, vector<16x128xf32>
    tpu.vector_store %arg14[%c0_27, %c0_28], %31 {strides = array<i32>} : memref<16x128xf32, #tpu.memory_space<vmem>>, vector<16x128xf32>,
    %c0_29 = arith.constant 0 : index
    %c0_30 = arith.constant 0 : index
    %33 = vector.load %arg8[%c0_29, %c0_30] : memref<128x128xf32, #tpu.memory_space<vmem>>, vector<128x128xf32>
    %cst_31 = arith.constant dense<0.000000e+00> : vector<16x128xf32>
    %34 = tpu.matmul %27, %33, %cst_31 {dimension_numbers = #tpu.dot_dimension_numbers<[1], [0], [0], [1], [0, 0, 1, 1], [], []>} : vector<16x128xf32>, vector<128x128xf32>, vector<16x128xf32> -> vector<16x128xf32>
    %c0_32 = arith.constant 0 : index
    %c0_33 = arith.constant 0 : index
    %35 = vector.load %arg15[%c0_32, %c0_33] : memref<16x128xf32, #tpu.memory_space<vmem>>, vector<16x128xf32>
    tpu.vector_store %arg15[%c0_32, %c0_33], %34 {strides = array<i32>} : memref<16x128xf32, #tpu.memory_space<vmem>>, vector<16x128xf32>,
    %c0_34 = arith.constant 0 : index
    %c0_35 = arith.constant 0 : index
    %36 = vector.load %arg9[%c0_34, %c0_35] : memref<128x128xf32, #tpu.memory_space<vmem>>, vector<128x128xf32>
    %cst_36 = arith.constant dense<0.000000e+00> : vector<16x128xf32>
    %37 = tpu.matmul %27, %36, %cst_36 {dimension_numbers = #tpu.dot_dimension_numbers<[1], [0], [0], [1], [0, 0, 1, 1], [], []>} : vector<16x128xf32>, vector<128x128xf32>, vector<16x128xf32> -> vector<16x128xf32>
    %c0_37 = arith.constant 0 : index
    %c0_38 = arith.constant 0 : index
    %38 = vector.load %arg16[%c0_37, %c0_38] : memref<16x128xf32, #tpu.memory_space<vmem>>, vector<16x128xf32>
    tpu.vector_store %arg16[%c0_37, %c0_38], %37 {strides = array<i32>} : memref<16x128xf32, #tpu.memory_space<vmem>>, vector<16x128xf32>,
    %c0_39 = arith.constant 0 : index
    %c0_40 = arith.constant 0 : index
    %39 = vector.load %arg2[%c0_39, %c0_40] : memref<8x128xf32, #tpu.memory_space<vmem>>, vector<8x128xf32>
    %c0_41 = arith.constant 0 : index
    %c0_42 = arith.constant 0 : index
    %40 = vector.load %arg6[%c0_41, %c0_42] : memref<128x128xf32, #tpu.memory_space<vmem>>, vector<128x128xf32>
    %cst_43 = arith.constant dense<0.000000e+00> : vector<8x128xf32>
    %41 = tpu.matmul %39, %40, %cst_43 {dimension_numbers = #tpu.dot_dimension_numbers<[1], [0], [0], [1], [0, 0, 1, 1], [], []>} : vector<8x128xf32>, vector<128x128xf32>, vector<8x128xf32> -> vector<8x128xf32>
    %42 = vector.broadcast %3 : vector<1x128xf32> to vector<8x128xf32>
    %43 = arith.addf %41, %42 : vector<8x128xf32>
    %c0_44 = arith.constant 0 : index
    %c0_45 = arith.constant 0 : index
    %44 = vector.load %arg8[%c0_44, %c0_45] : memref<128x128xf32, #tpu.memory_space<vmem>>, vector<128x128xf32>
    %cst_46 = arith.constant dense<0.000000e+00> : vector<8x128xf32>
    %45 = tpu.matmul %43, %44, %cst_46 {dimension_numbers = #tpu.dot_dimension_numbers<[1], [0], [0], [1], [0, 0, 1, 1], [], []>} : vector<8x128xf32>, vector<128x128xf32>, vector<8x128xf32> -> vector<8x128xf32>
    %c0_47 = arith.constant 0 : index
    %c0_48 = arith.constant 0 : index
    %46 = vector.load %arg17[%c0_47, %c0_48] : memref<8x128xf32, #tpu.memory_space<vmem>>, vector<8x128xf32>
    tpu.vector_store %arg17[%c0_47, %c0_48], %45 {strides = array<i32>} : memref<8x128xf32, #tpu.memory_space<vmem>>, vector<8x128xf32>,
    %c0_49 = arith.constant 0 : index
    %c0_50 = arith.constant 0 : index
    %47 = vector.load %arg9[%c0_49, %c0_50] : memref<128x128xf32, #tpu.memory_space<vmem>>, vector<128x128xf32>
    %cst_51 = arith.constant dense<0.000000e+00> : vector<8x128xf32>
    %48 = tpu.matmul %43, %47, %cst_51 {dimension_numbers = #tpu.dot_dimension_numbers<[1], [0], [0], [1], [0, 0, 1, 1], [], []>} : vector<8x128xf32>, vector<128x128xf32>, vector<8x128xf32> -> vector<8x128xf32>
    %c0_52 = arith.constant 0 : index
    %c0_53 = arith.constant 0 : index
    %49 = vector.load %arg18[%c0_52, %c0_53] : memref<8x128xf32, #tpu.memory_space<vmem>>, vector<8x128xf32>
    tpu.vector_store %arg18[%c0_52, %c0_53], %48 {strides = array<i32>} : memref<8x128xf32, #tpu.memory_space<vmem>>, vector<8x128xf32>,
    %c0_i32 = arith.constant 0 : i32
    %c16_i32 = arith.constant 16 : i32
    %50 = arith.muli %c0_i32, %c16_i32 : i32
    %c8_i32 = arith.constant 8 : i32
    %51 = arith.muli %c0_i32, %c8_i32 : i32
    %52 = tpu.assume_multiple %50, 8 : i32
    %53 = tpu.assume_multiple %51, 8 : i32
    %54 = arith.index_cast %52 : i32 to index
    %c0_54 = arith.constant 0 : index
    %55 = vector.load %arg14[%54, %c0_54] : memref<16x128xf32, #tpu.memory_space<vmem>>, vector<16x128xf32>
    %56 = arith.index_cast %52 : i32 to index
    %c0_55 = arith.constant 0 : index
    %57 = vector.load %arg15[%56, %c0_55] : memref<16x128xf32, #tpu.memory_space<vmem>>, vector<16x128xf32>
    %cst_56 = arith.constant dense<0.000000e+00> : vector<16x16xf32>
    %58 = tpu.matmul %55, %57, %cst_56 {dimension_numbers = #tpu.dot_dimension_numbers<[1], [1], [0], [0], [0, 0, 1, 0], [], []>} : vector<16x128xf32>, vector<16x128xf32>, vector<16x16xf32> -> vector<16x16xf32>
    %59 = arith.index_cast %53 : i32 to index
    %c0_57 = arith.constant 0 : index
    %60 = vector.load %arg17[%59, %c0_57] : memref<8x128xf32, #tpu.memory_space<vmem>>, vector<8x128xf32>
    %cst_58 = arith.constant dense<0.000000e+00> : vector<16x8xf32>
    %61 = tpu.matmul %55, %60, %cst_58 {dimension_numbers = #tpu.dot_dimension_numbers<[1], [1], [0], [0], [0, 0, 1, 0], [], []>} : vector<16x128xf32>, vector<8x128xf32>, vector<16x8xf32> -> vector<16x8xf32>
    %cst_59 = arith.constant dense<0xFF800000> : vector<16xf32>
    %62 = vector.multi_reduction <maximumf>, %58, %cst_59 [1] : vector<16x16xf32> to vector<16xf32>
    %63 = vector.shape_cast %62 : vector<16xf32> to vector<16x1xf32>
    %cst_60 = arith.constant dense<0xFF800000> : vector<16xf32>
    %64 = vector.multi_reduction <maximumf>, %61, %cst_60 [1] : vector<16x8xf32> to vector<16xf32>
    %65 = vector.shape_cast %64 : vector<16xf32> to vector<16x1xf32>
    %66 = arith.maximumf %63, %65 : vector<16x1xf32>
    %67 = vector.broadcast %66 : vector<16x1xf32> to vector<16x16xf32>
    %68 = arith.subf %58, %67 : vector<16x16xf32>
    %69 = math.exp %68 : vector<16x16xf32>
    %70 = vector.broadcast %66 : vector<16x1xf32> to vector<16x8xf32>
    %71 = arith.subf %61, %70 : vector<16x8xf32>
    %72 = math.exp %71 : vector<16x8xf32>
    %cst_61 = arith.constant dense<0.000000e+00> : vector<16xf32>
    %73 = vector.multi_reduction <add>, %69, %cst_61 [1] : vector<16x16xf32> to vector<16xf32>
    %74 = vector.shape_cast %73 : vector<16xf32> to vector<16x1xf32>
    %cst_62 = arith.constant dense<0.000000e+00> : vector<16xf32>
    %75 = vector.multi_reduction <add>, %72, %cst_62 [1] : vector<16x8xf32> to vector<16xf32>
    %76 = vector.shape_cast %75 : vector<16xf32> to vector<16x1xf32>
    %77 = arith.addf %74, %76 : vector<16x1xf32>
    %78 = arith.index_cast %52 : i32 to index
    %c0_63 = arith.constant 0 : index
    %79 = vector.load %arg16[%78, %c0_63] : memref<16x128xf32, #tpu.memory_space<vmem>>, vector<16x128xf32>
    %cst_64 = arith.constant dense<0.000000e+00> : vector<16x128xf32>
    %80 = tpu.matmul %69, %79, %cst_64 {dimension_numbers = #tpu.dot_dimension_numbers<[1], [0], [0], [1], [0, 0, 1, 1], [], []>} : vector<16x16xf32>, vector<16x128xf32>, vector<16x128xf32> -> vector<16x128xf32>
    %81 = arith.index_cast %53 : i32 to index
    %c0_65 = arith.constant 0 : index
    %82 = vector.load %arg18[%81, %c0_65] : memref<8x128xf32, #tpu.memory_space<vmem>>, vector<8x128xf32>
    %cst_66 = arith.constant dense<0.000000e+00> : vector<16x128xf32>
    %83 = tpu.matmul %72, %82, %cst_66 {dimension_numbers = #tpu.dot_dimension_numbers<[1], [0], [0], [1], [0, 0, 1, 1], [], []>} : vector<16x8xf32>, vector<8x128xf32>, vector<16x128xf32> -> vector<16x128xf32>
    %84 = arith.addf %80, %83 : vector<16x128xf32>
    %85 = vector.broadcast %77 : vector<16x1xf32> to vector<16x128xf32>
    %86 = arith.divf %84, %85 : vector<16x128xf32>
    %87 = arith.index_cast %52 : i32 to index
    %c0_67 = arith.constant 0 : index
    %88 = vector.load %arg19[%87, %c0_67] : memref<16x128xf32, #tpu.memory_space<vmem>>, vector<16x128xf32>
    tpu.vector_store %arg19[%87, %c0_67], %86 {strides = array<i32>} : memref<16x128xf32, #tpu.memory_space<vmem>>, vector<16x128xf32>,
    %c1_i32 = arith.constant 1 : i32
    %c0_68 = arith.constant 0 : index
    %c0_69 = arith.constant 0 : index
    %89 = vector.load %arg19[%c0_68, %c0_69] : memref<16x128xf32, #tpu.memory_space<vmem>>, vector<16x128xf32>
    %c0_70 = arith.constant 0 : index
    %c0_71 = arith.constant 0 : index
    %90 = vector.load %arg10[%c0_70, %c0_71] : memref<128x128xf32, #tpu.memory_space<vmem>>, vector<128x128xf32>
    %cst_72 = arith.constant dense<0.000000e+00> : vector<16x128xf32>
    %91 = tpu.matmul %89, %90, %cst_72 {dimension_numbers = #tpu.dot_dimension_numbers<[1], [0], [0], [1], [0, 0, 1, 1], [], []>} : vector<16x128xf32>, vector<128x128xf32>, vector<16x128xf32> -> vector<16x128xf32>
    %92 = vector.broadcast %4 : vector<1x128xf32> to vector<16x128xf32>
    %93 = arith.addf %91, %92 : vector<16x128xf32>
    %cst_73 = arith.constant dense<0.000000e+00> : vector<1x128xf32>
    %94 = tpu.matmul %8, %93, %cst_73 {dimension_numbers = #tpu.dot_dimension_numbers<[1], [0], [0], [1], [0, 0, 1, 1], [], []>} : vector<1x16xf32>, vector<16x128xf32>, vector<1x128xf32> -> vector<1x128xf32>
    %cst_74 = arith.constant dense<0.000000e+00> : vector<16x128xf32>
    %95 = tpu.matmul %7, %94, %cst_74 {dimension_numbers = #tpu.dot_dimension_numbers<[1], [0], [0], [1], [0, 0, 1, 1], [], []>} : vector<16x1xf32>, vector<1x128xf32>, vector<16x128xf32> -> vector<16x128xf32>
    %96 = arith.subf %93, %95 : vector<16x128xf32>
    %97 = arith.mulf %96, %96 : vector<16x128xf32>
    %cst_75 = arith.constant dense<0.000000e+00> : vector<1x128xf32>
    %98 = tpu.matmul %8, %97, %cst_75 {dimension_numbers = #tpu.dot_dimension_numbers<[1], [0], [0], [1], [0, 0, 1, 1], [], []>} : vector<1x16xf32>, vector<16x128xf32>, vector<1x128xf32> -> vector<1x128xf32>
    %cst_76 = arith.constant dense<0.000000e+00> : vector<16x128xf32>
    %99 = tpu.matmul %7, %98, %cst_76 {dimension_numbers = #tpu.dot_dimension_numbers<[1], [0], [0], [1], [0, 0, 1, 1], [], []>} : vector<16x1xf32>, vector<1x128xf32>, vector<16x128xf32> -> vector<16x128xf32>
    %cst_77 = arith.constant 9.99999974E-6 : f32
    %100 = vector.broadcast %cst_77 : f32 to vector<16x128xf32>
    %101 = arith.addf %99, %100 : vector<16x128xf32>
    %102 = math.rsqrt %101 : vector<16x128xf32>
    %103 = arith.mulf %96, %102 : vector<16x128xf32>
    %104 = vector.broadcast %5 : vector<1x128xf32> to vector<16x128xf32>
    %105 = arith.mulf %103, %104 : vector<16x128xf32>
    %106 = vector.broadcast %6 : vector<1x128xf32> to vector<16x128xf32>
    %107 = arith.addf %105, %106 : vector<16x128xf32>
    %c0_78 = arith.constant 0 : index
    %c0_79 = arith.constant 0 : index
    %108 = vector.load %arg13[%c0_78, %c0_79] : memref<16x128xf32, #tpu.memory_space<vmem>>, vector<16x128xf32>
    tpu.vector_store %arg13[%c0_78, %c0_79], %107 {strides = array<i32>} : memref<16x128xf32, #tpu.memory_space<vmem>>, vector<16x128xf32>,
    return
  }
  func.func @transform_0(%arg0: i32) -> (i32, i32) {
    %c0_i32 = arith.constant 0 : i32
    %c0_i32_0 = arith.constant 0 : i32
    return %arg0, %c0_i32 : i32, i32
  }
  func.func @transform_1(%arg0: i32) -> (i32, i32) {
    %c0_i32 = arith.constant 0 : i32
    %c0_i32_0 = arith.constant 0 : i32
    return %arg0, %c0_i32 : i32, i32
  }
  func.func @transform_2(%arg0: i32) -> (i32, i32) {
    %c0_i32 = arith.constant 0 : i32
    %c0_i32_0 = arith.constant 0 : i32
    %c0_i32_1 = arith.constant 0 : i32
    return %c0_i32, %c0_i32_0 : i32, i32
  }
  func.func @transform_3(%arg0: i32) -> (i32, i32) {
    %c0_i32 = arith.constant 0 : i32
    %c0_i32_0 = arith.constant 0 : i32
    %c0_i32_1 = arith.constant 0 : i32
    return %c0_i32, %c0_i32_0 : i32, i32
  }
  func.func @transform_4(%arg0: i32) -> (i32, i32) {
    %c0_i32 = arith.constant 0 : i32
    %c0_i32_0 = arith.constant 0 : i32
    %c0_i32_1 = arith.constant 0 : i32
    return %c0_i32, %c0_i32_0 : i32, i32
  }
  func.func @transform_5(%arg0: i32) -> (i32, i32) {
    %c0_i32 = arith.constant 0 : i32
    %c0_i32_0 = arith.constant 0 : i32
    %c0_i32_1 = arith.constant 0 : i32
    return %c0_i32, %c0_i32_0 : i32, i32
  }
  func.func @transform_6(%arg0: i32) -> (i32, i32) {
    %c0_i32 = arith.constant 0 : i32
    %c0_i32_0 = arith.constant 0 : i32
    %c0_i32_1 = arith.constant 0 : i32
    return %c0_i32, %c0_i32_0 : i32, i32
  }
  func.func @transform_7(%arg0: i32) -> (i32, i32) {
    %c0_i32 = arith.constant 0 : i32
    %c0_i32_0 = arith.constant 0 : i32
    %c0_i32_1 = arith.constant 0 : i32
    return %c0_i32, %c0_i32_0 : i32, i32
  }
  func.func @transform_8(%arg0: i32) -> (i32, i32) {
    %c0_i32 = arith.constant 0 : i32
    %c0_i32_0 = arith.constant 0 : i32
    %c0_i32_1 = arith.constant 0 : i32
    return %c0_i32, %c0_i32_0 : i32, i32
  }
  func.func @transform_9(%arg0: i32) -> (i32, i32) {
    %c0_i32 = arith.constant 0 : i32
    %c0_i32_0 = arith.constant 0 : i32
    %c0_i32_1 = arith.constant 0 : i32
    return %c0_i32, %c0_i32_0 : i32, i32
  }
  func.func @transform_10(%arg0: i32) -> (i32, i32) {
    %c0_i32 = arith.constant 0 : i32
    %c0_i32_0 = arith.constant 0 : i32
    %c0_i32_1 = arith.constant 0 : i32
    return %c0_i32, %c0_i32_0 : i32, i32
  }
  func.func @transform_11(%arg0: i32) -> (i32, i32) {
    %c0_i32 = arith.constant 0 : i32
    %c0_i32_0 = arith.constant 0 : i32
    %c0_i32_1 = arith.constant 0 : i32
    return %c0_i32, %c0_i32_0 : i32, i32
  }
  func.func @transform_12(%arg0: i32) -> (i32, i32) {
    %c0_i32 = arith.constant 0 : i32
    %c0_i32_0 = arith.constant 0 : i32
    return %arg0, %c0_i32 : i32, i32
  }
}

</mosaic_0001>

<llo_original>
// kernel: tpu_custom_call.1
$region0: #{tpu_custom_call.1}
  #allocation0 [shape = 'u32[]', space=smem, size = 0x4, offset = 0x4, fixed_abs, tag = 'smem constant byte address 0x4 - core index']
  #allocation1 [shape = 'u32[144,128]{1,0:T(1,128)}', space=vmem, size = 0x12000, scoped, tag = 'internal scratch']
  #allocation2 [shape = 'f32[16,128]{1,0:T(8,128)}', space=vmem, size = 0x2000, scoped, tag = 'scratch operand']
  #allocation3 [shape = 'f32[16,128]{1,0:T(8,128)}', space=vmem, size = 0x2000, scoped, tag = 'scratch operand']
  #allocation4 [shape = 'f32[16,128]{1,0:T(8,128)}', space=vmem, size = 0x2000, scoped, tag = 'scratch operand']
  #allocation5 [shape = 'f32[8,128]{1,0:T(8,128)}', space=vmem, size = 0x1000, scoped, tag = 'scratch operand']
  #allocation6 [shape = 'f32[8,128]{1,0:T(8,128)}', space=vmem, size = 0x1000, scoped, tag = 'scratch operand']
  #allocation7 [shape = 'f32[16,128]{1,0:T(8,128)}', space=vmem, size = 0x2000, scoped, tag = 'scratch operand']
  %s0 = inlined_call_operand.hbm [shape: f32[32,128], index: 0, kind: input, shape index: {}]
  %s1 = inlined_call_operand.vmem [shape: f32[16,128], index: 1, kind: input, shape index: {}]
  %s2 = inlined_call_operand.vmem [shape: f32[16,1], index: 2, kind: input, shape index: {}]
  %s3 = inlined_call_operand.hbm [shape: f32[1,16], index: 3, kind: input, shape index: {}]
  %s4 = inlined_call_operand.hbm [shape: f32[128,128], index: 4, kind: input, shape index: {}]
  %s5 = inlined_call_operand.hbm [shape: f32[128,128], index: 5, kind: input, shape index: {}]
  %s6 = inlined_call_operand.hbm [shape: f32[128,128], index: 6, kind: input, shape index: {}]
  %s7 = inlined_call_operand.hbm [shape: f32[128,128], index: 7, kind: input, shape index: {}]
  %s8 = inlined_call_operand.hbm [shape: f32[128,128], index: 8, kind: input, shape index: {}]
  %s9 = inlined_call_operand.hbm [shape: f32[128,128], index: 9, kind: input, shape index: {}]
  %s10 = inlined_call_operand.vmem [shape: f32[4,128], index: 10, kind: input, shape index: {}]
  %s11 = inlined_call_operand.vmem [shape: f32[3,128], index: 11, kind: input, shape index: {}]
  %s12 = inlined_call_operand.hbm [shape: f32[32,128], index: 12, kind: output, shape index: {}]
  %s13 = sld [smem:[#allocation0]]
  $region113: #{tpu_custom_call.1} parent=0
    _
  %s15 = ssub.s32 1, %s13
  %s16 = scalar_select 0, %s15, %s13
  $region1: #{tpu_custom_call.1} parent=0
    #allocation8 [shape = 'u8[16384]{0}', space=vmem, size = 0x4000, scoped, tag = 'input window, operand 0']
    #allocation9 [shape = 's32[2]{0}', space=sflag, size = 0x8, scoped, tag = 'scoped memory for tpu_custom_call.1']
    #allocation10 [shape = 's32[2]{0}', space=sflag, size = 0x8, scoped, tag = 'scoped memory for tpu_custom_call.1']
    #allocation11 [shape = 'u8[512]{0}', space=vmem, size = 0x400, scoped, tag = 'input window, operand 3, single buffered']
    #allocation12 [shape = 's32[1]{0}', space=sflag, size = 0x4, scoped, tag = 'scoped memory for tpu_custom_call.1']
    #allocation13 [shape = 'u8[65536]{0}', space=vmem, size = 0x10000, scoped, tag = 'input window, operand 4, single buffered']
    #allocation14 [shape = 'u8[65536]{0}', space=vmem, size = 0x10000, scoped, tag = 'input window, operand 5, single buffered']
    #allocation15 [shape = 's32[1]{0}', space=sflag, size = 0x4, scoped, tag = 'scoped memory for tpu_custom_call.1']
    #allocation16 [shape = 'u8[65536]{0}', space=vmem, size = 0x10000, scoped, tag = 'input window, operand 6, single buffered']
    #allocation17 [shape = 'u8[65536]{0}', space=vmem, size = 0x10000, scoped, tag = 'input window, operand 7, single buffered']
    #allocation18 [shape = 's32[1]{0}', space=sflag, size = 0x4, scoped, tag = 'scoped memory for tpu_custom_call.1']
    #allocation19 [shape = 'u8[65536]{0}', space=vmem, size = 0x10000, scoped, tag = 'input window, operand 8, single buffered']
    #allocation20 [shape = 'u8[65536]{0}', space=vmem, size = 0x10000, scoped, tag = 'input window, operand 9, single buffered']
    #allocation21 [shape = 's32[1]{0}', space=sflag, size = 0x4, scoped, tag = 'scoped memory for tpu_custom_call.1']
    #allocation22 [shape = 'u8[16384]{0}', space=vmem, size = 0x4000, scoped, tag = 'output window, operand 0']
    %17 = vsyncpa [#allocation9], 0
    %s18 = scalar_lea.sflag [#allocation9], 1
    %19 = vsyncpa %s18, 0
    %20 = vsyncpa [#allocation12], 0
    %21 = vsyncpa [#allocation15], 0
    %22 = vsyncpa [#allocation18], 0
    %23 = vsyncpa [#allocation21], 0
    %24 = vsyncpa [#allocation10], 0
    %s25 = scalar_lea.sflag [#allocation10], 1
    %26 = vsyncpa %s25, 0
    loop: start=0, step=1, limit=4
    $region2: #{tpu_custom_call.1} parent=1 // loop_pre_header
      _
    $region3: #{tpu_custom_call.1} parent=1 // loop_header
      %s28 = sphi 0, %s32
      %p29 = scmp.ge.s32.totalorder %s28, 4
      %s38 = sphi 0, %s40
      %s41 = sphi 0, %s38
      %s42 = sphi 0, %s41
      %s58 = sphi 0, %s42
      %s64 = sphi 0, %s66
      %s67 = sphi 0, %s64
      %s68 = sphi 0, %s67
      %s84 = sphi 0, %s68
      %s88 = sphi 0, %s88
      %s90 = sphi 0, %s88
      %s91 = sphi 0, %s90
      %s105 = sphi 0, %s91
      %s109 = sphi 0, %s109
      %s111 = sphi 0, %s109
      %s112 = sphi 0, %s111
      %s126 = sphi 0, %s112
      %s130 = sphi 0, %s130
      %s132 = sphi 0, %s130
      %s133 = sphi 0, %s132
      %s147 = sphi 0, %s133
      %s151 = sphi 0, %s151
      %s153 = sphi 0, %s151
      %s154 = sphi 0, %s153
      %s168 = sphi 0, %s154
      %s172 = sphi 0, %s172
      %s174 = sphi 0, %s172
      %s175 = sphi 0, %s174
      %s189 = sphi 0, %s175
      %s193 = sphi 0, %s193
      %s195 = sphi 0, %s193
      %s196 = sphi 0, %s195
      %s210 = sphi 0, %s196
      %s214 = sphi 0, %s214
      %s216 = sphi 0, %s214
      %s217 = sphi 0, %s216
      %s231 = sphi 0, %s217
      %s235 = sphi 0, %s235
      %s237 = sphi 0, %s235
      %s238 = sphi 0, %s237
      %s252 = sphi 0, %s238
      %s256 = sphi 0, %s256
      %s258 = sphi 0, %s256
      %s259 = sphi 0, %s258
      %s273 = sphi 0, %s259
      %s277 = sphi 0, %s277
      %s279 = sphi 0, %s277
      %s280 = sphi 0, %s279
      %s294 = sphi 0, %s280
      %s300 = sphi 0, %s302
      %s303 = sphi 0, %s300
      %s304 = sphi 0, %s303
      %s320 = sphi 0, %s304
    $region4: #{tpu_custom_call.1} parent=1 // loop_header_branch
      %31 = sbr.rel (%p29) target = $region8
    $region5: #{tpu_custom_call.1} parent=1 // loop_body
      %s33 = ssub.s32 %s28, 1
      %s34 = ssub.s32 %s28, 2
      %s35 = sadd.s32 %s28, 1
      %s36 = ssub.s32 %s28, %s35
      %p37 = scmp.eq.s32.totalorder %s36, 0
      %s39 = sadd.s32 %s38, 1
      %s40 = scalar_select %p37, %s38, %s39
      %p43 = pneg %p37
      %p44 = scmp.eq.s32.totalorder %s28, 1
      %p45 = por %p43, %p44
      %p46 = scmp.ne.s32.totalorder %s38, %s41
      %p47 = scmp.eq.s32.totalorder %s28, 0
      %p48 = por %p46, %p47
      %p49 = scmp.ne.s32.totalorder %s38, %s41
      %p50 = scmp.eq.s32.totalorder %s33, 1
      %p51 = por %p49, %p50
      %p52 = scmp.ne.s32.totalorder %s41, %s42
      %p53 = scmp.eq.s32.totalorder %s33, 0
      %p54 = por %p52, %p53
      %p55 = scmp.ne.s32.totalorder %s41, %s42
      %p56 = scmp.eq.s32.totalorder %s34, 1
      %p57 = por %p55, %p56
      %p59 = scmp.ne.s32.totalorder %s42, %s58
      %p60 = scmp.eq.s32.totalorder %s34, 0
      %p61 = por %p59, %p60
      %s62 = ssub.s32 %s28, %s35
      %p63 = scmp.eq.s32.totalorder %s62, 0
      %s65 = sadd.s32 %s64, 1
      %s66 = scalar_select %p63, %s64, %s65
      %p69 = pneg %p63
      %p70 = scmp.eq.s32.totalorder %s28, 1
      %p71 = por %p69, %p70
      %p72 = scmp.ne.s32.totalorder %s64, %s67
      %p73 = scmp.eq.s32.totalorder %s28, 0
      %p74 = por %p72, %p73
      %p75 = scmp.ne.s32.totalorder %s64, %s67
      %p76 = scmp.eq.s32.totalorder %s33, 1
      %p77 = por %p75, %p76
      %p78 = scmp.ne.s32.totalorder %s67, %s68
      %p79 = scmp.eq.s32.totalorder %s33, 0
      %p80 = por %p78, %p79
      %p81 = scmp.ne.s32.totalorder %s67, %s68
      %p82 = scmp.eq.s32.totalorder %s34, 1
      %p83 = por %p81, %p82
      %p85 = scmp.ne.s32.totalorder %s68, %s84
      %p86 = scmp.eq.s32.totalorder %s34, 0
      %p87 = por %p85, %p86
      %s89 = sadd.s32 %s88, 1
      %p92 = scmp.eq.s32.totalorder %s28, 1
      %p93 = scmp.ne.s32.totalorder %s88, %s90
      %p94 = scmp.eq.s32.totalorder %s28, 0
      %p95 = por %p93, %p94
      %p96 = scmp.ne.s32.totalorder %s88, %s90
      %p97 = scmp.eq.s32.totalorder %s33, 1
      %p98 = por %p96, %p97
      %p99 = scmp.ne.s32.totalorder %s90, %s91
      %p100 = scmp.eq.s32.totalorder %s33, 0
      %p101 = por %p99, %p100
      %p102 = scmp.ne.s32.totalorder %s90, %s91
      %p103 = scmp.eq.s32.totalorder %s34, 1
      %p104 = por %p102, %p103
      %p106 = scmp.ne.s32.totalorder %s91, %s105
      %p107 = scmp.eq.s32.totalorder %s34, 0
      %p108 = por %p106, %p107
      %s110 = sadd.s32 %s109, 1
      %p113 = scmp.eq.s32.totalorder %s28, 1
      %p114 = scmp.ne.s32.totalorder %s109, %s111
      %p115 = scmp.eq.s32.totalorder %s28, 0
      %p116 = por %p114, %p115
      %p117 = scmp.ne.s32.totalorder %s109, %s111
      %p118 = scmp.eq.s32.totalorder %s33, 1
      %p119 = por %p117, %p118
      %p120 = scmp.ne.s32.totalorder %s111, %s112
      %p121 = scmp.eq.s32.totalorder %s33, 0
      %p122 = por %p120, %p121
      %p123 = scmp.ne.s32.totalorder %s111, %s112
      %p124 = scmp.eq.s32.totalorder %s34, 1
      %p125 = por %p123, %p124
      %p127 = scmp.ne.s32.totalorder %s112, %s126
      %p128 = scmp.eq.s32.totalorder %s34, 0
      %p129 = por %p127, %p128
      %s131 = sadd.s32 %s130, 1
      %p134 = scmp.eq.s32.totalorder %s28, 1
      %p135 = scmp.ne.s32.totalorder %s130, %s132
      %p136 = scmp.eq.s32.totalorder %s28, 0
      %p137 = por %p135, %p136
      %p138 = scmp.ne.s32.totalorder %s130, %s132
      %p139 = scmp.eq.s32.totalorder %s33, 1
      %p140 = por %p138, %p139
      %p141 = scmp.ne.s32.totalorder %s132, %s133
      %p142 = scmp.eq.s32.totalorder %s33, 0
      %p143 = por %p141, %p142
      %p144 = scmp.ne.s32.totalorder %s132, %s133
      %p145 = scmp.eq.s32.totalorder %s34, 1
      %p146 = por %p144, %p145
      %p148 = scmp.ne.s32.totalorder %s133, %s147
      %p149 = scmp.eq.s32.totalorder %s34, 0
      %p150 = por %p148, %p149
      %s152 = sadd.s32 %s151, 1
      %p155 = scmp.eq.s32.totalorder %s28, 1
      %p156 = scmp.ne.s32.totalorder %s151, %s153
      %p157 = scmp.eq.s32.totalorder %s28, 0
      %p158 = por %p156, %p157
      %p159 = scmp.ne.s32.totalorder %s151, %s153
      %p160 = scmp.eq.s32.totalorder %s33, 1
      %p161 = por %p159, %p160
      %p162 = scmp.ne.s32.totalorder %s153, %s154
      %p163 = scmp.eq.s32.totalorder %s33, 0
      %p164 = por %p162, %p163
      %p165 = scmp.ne.s32.totalorder %s153, %s154
      %p166 = scmp.eq.s32.totalorder %s34, 1
      %p167 = por %p165, %p166
      %p169 = scmp.ne.s32.totalorder %s154, %s168
      %p170 = scmp.eq.s32.totalorder %s34, 0
      %p171 = por %p169, %p170
      %s173 = sadd.s32 %s172, 1
      %p176 = scmp.eq.s32.totalorder %s28, 1
      %p177 = scmp.ne.s32.totalorder %s172, %s174
      %p178 = scmp.eq.s32.totalorder %s28, 0
      %p179 = por %p177, %p178
      %p180 = scmp.ne.s32.totalorder %s172, %s174
      %p181 = scmp.eq.s32.totalorder %s33, 1
      %p182 = por %p180, %p181
      %p183 = scmp.ne.s32.totalorder %s174, %s175
      %p184 = scmp.eq.s32.totalorder %s33, 0
      %p185 = por %p183, %p184
      %p186 = scmp.ne.s32.totalorder %s174, %s175
      %p187 = scmp.eq.s32.totalorder %s34, 1
      %p188 = por %p186, %p187
      %p190 = scmp.ne.s32.totalorder %s175, %s189
      %p191 = scmp.eq.s32.totalorder %s34, 0
      %p192 = por %p190, %p191
      %s194 = sadd.s32 %s193, 1
      %p197 = scmp.eq.s32.totalorder %s28, 1
      %p198 = scmp.ne.s32.totalorder %s193, %s195
      %p199 = scmp.eq.s32.totalorder %s28, 0
      %p200 = por %p198, %p199
      %p201 = scmp.ne.s32.totalorder %s193, %s195
      %p202 = scmp.eq.s32.totalorder %s33, 1
      %p203 = por %p201, %p202
      %p204 = scmp.ne.s32.totalorder %s195, %s196
      %p205 = scmp.eq.s32.totalorder %s33, 0
      %p206 = por %p204, %p205
      %p207 = scmp.ne.s32.totalorder %s195, %s196
      %p208 = scmp.eq.s32.totalorder %s34, 1
      %p209 = por %p207, %p208
      %p211 = scmp.ne.s32.totalorder %s196, %s210
      %p212 = scmp.eq.s32.totalorder %s34, 0
      %p213 = por %p211, %p212
      %s215 = sadd.s32 %s214, 1
      %p218 = scmp.eq.s32.totalorder %s28, 1
      %p219 = scmp.ne.s32.totalorder %s214, %s216
      %p220 = scmp.eq.s32.totalorder %s28, 0
      %p221 = por %p219, %p220
      %p222 = scmp.ne.s32.totalorder %s214, %s216
      %p223 = scmp.eq.s32.totalorder %s33, 1
      %p224 = por %p222, %p223
      %p225 = scmp.ne.s32.totalorder %s216, %s217
      %p226 = scmp.eq.s32.totalorder %s33, 0
      %p227 = por %p225, %p226
      %p228 = scmp.ne.s32.totalorder %s216, %s217
      %p229 = scmp.eq.s32.totalorder %s34, 1
      %p230 = por %p228, %p229
      %p232 = scmp.ne.s32.totalorder %s217, %s231
      %p233 = scmp.eq.s32.totalorder %s34, 0
      %p234 = por %p232, %p233
      %s236 = sadd.s32 %s235, 1
      %p239 = scmp.eq.s32.totalorder %s28, 1
      %p240 = scmp.ne.s32.totalorder %s235, %s237
      %p241 = scmp.eq.s32.totalorder %s28, 0
      %p242 = por %p240, %p241
      %p243 = scmp.ne.s32.totalorder %s235, %s237
      %p244 = scmp.eq.s32.totalorder %s33, 1
      %p245 = por %p243, %p244
      %p246 = scmp.ne.s32.totalorder %s237, %s238
      %p247 = scmp.eq.s32.totalorder %s33, 0
      %p248 = por %p246, %p247
      %p249 = scmp.ne.s32.totalorder %s237, %s238
      %p250 = scmp.eq.s32.totalorder %s34, 1
      %p251 = por %p249, %p250
      %p253 = scmp.ne.s32.totalorder %s238, %s252
      %p254 = scmp.eq.s32.totalorder %s34, 0
      %p255 = por %p253, %p254
      %s257 = sadd.s32 %s256, 1
      %p260 = scmp.eq.s32.totalorder %s28, 1
      %p261 = scmp.ne.s32.totalorder %s256, %s258
      %p262 = scmp.eq.s32.totalorder %s28, 0
      %p263 = por %p261, %p262
      %p264 = scmp.ne.s32.totalorder %s256, %s258
      %p265 = scmp.eq.s32.totalorder %s33, 1
      %p266 = por %p264, %p265
      %p267 = scmp.ne.s32.totalorder %s258, %s259
      %p268 = scmp.eq.s32.totalorder %s33, 0
      %p269 = por %p267, %p268
      %p270 = scmp.ne.s32.totalorder %s258, %s259
      %p271 = scmp.eq.s32.totalorder %s34, 1
      %p272 = por %p270, %p271
      %p274 = scmp.ne.s32.totalorder %s259, %s273
      %p275 = scmp.eq.s32.totalorder %s34, 0
      %p276 = por %p274, %p275
      %s278 = sadd.s32 %s277, 1
      %p281 = scmp.eq.s32.totalorder %s28, 1
      %p282 = scmp.ne.s32.totalorder %s277, %s279
      %p283 = scmp.eq.s32.totalorder %s28, 0
      %p284 = por %p282, %p283
      %p285 = scmp.ne.s32.totalorder %s277, %s279
      %p286 = scmp.eq.s32.totalorder %s33, 1
      %p287 = por %p285, %p286
      %p288 = scmp.ne.s32.totalorder %s279, %s280
      %p289 = scmp.eq.s32.totalorder %s33, 0
      %p290 = por %p288, %p289
      %p291 = scmp.ne.s32.totalorder %s279, %s280
      %p292 = scmp.eq.s32.totalorder %s34, 1
      %p293 = por %p291, %p292
      %p295 = scmp.ne.s32.totalorder %s280, %s294
      %p296 = scmp.eq.s32.totalorder %s34, 0
      %p297 = por %p295, %p296
      %s298 = ssub.s32 %s28, %s35
      %p299 = scmp.eq.s32.totalorder %s298, 0
      %s301 = sadd.s32 %s300, 1
      %s302 = scalar_select %p299, %s300, %s301
      %p305 = pneg %p299
      %p306 = scmp.eq.s32.totalorder %s28, 1
      %p307 = por %p305, %p306
      %p308 = scmp.ne.s32.totalorder %s300, %s303
      %p309 = scmp.eq.s32.totalorder %s28, 0
      %p310 = por %p308, %p309
      %p311 = scmp.ne.s32.totalorder %s300, %s303
      %p312 = scmp.eq.s32.totalorder %s33, 1
      %p313 = por %p311, %p312
      %p314 = scmp.ne.s32.totalorder %s303, %s304
      %p315 = scmp.eq.s32.totalorder %s33, 0
      %p316 = por %p314, %p315
      %p317 = scmp.ne.s32.totalorder %s303, %s304
      %p318 = scmp.eq.s32.totalorder %s34, 1
      %p319 = por %p317, %p318
      %p321 = scmp.ne.s32.totalorder %s304, %s320
      %p322 = scmp.eq.s32.totalorder %s34, 0
      %p323 = por %p321, %p322
      %p324 = scmp.le.s32.totalorder 1, %s28
      %p325 = scmp.lt.s32.totalorder %s28, 3
      %p326 = pnand %p324, %p325
      %p327 = pneg %p326
      // Predicated region
      $region9: #{tpu_custom_call.1} parent=5 // pred_check
        _
      $region10: #{tpu_custom_call.1} parent=5 // pred_check_branch
        %329 = sbr.rel (%p326) target = $region12
      $region11: #{tpu_custom_call.1} parent=5 // pred_region
        %s330 = ssub.s32 %s28, 1
        // Predicated region
        $region13: #{tpu_custom_call.1} parent=11 // pred_check
          %p331 = pneg %p101
        $region14: #{tpu_custom_call.1} parent=11 // pred_check_branch
          %333 = sbr.rel (%p331) target = $region16
        $region15: #{tpu_custom_call.1} parent=11 // pred_region
          _
        $region16: #{tpu_custom_call.1} parent=11 // pred_fallthru
          _
        // Predicated region
        $region17: #{tpu_custom_call.1} parent=11 // pred_check
          %p334 = pneg %p122
        $region18: #{tpu_custom_call.1} parent=11 // pred_check_branch
          %336 = sbr.rel (%p334) target = $region20
        $region19: #{tpu_custom_call.1} parent=11 // pred_region
          %s338 = ssub.s32 16, 16
          %339 = vsyncadd [#allocation12], %s338
          %s341 = sshll.u32 [#allocation11], 4
          %s342 = int_to_ptr.vmem [resolvable:$true] %s341
          %344 = dma.hbm_to_vmem [thread:$0]  %s3, 16, %s342, [#allocation12]
        $region20: #{tpu_custom_call.1} parent=11 // pred_fallthru
          _
        // Predicated region
        $region21: #{tpu_custom_call.1} parent=11 // pred_check
          %p345 = pneg %p143
        $region22: #{tpu_custom_call.1} parent=11 // pred_check_branch
          %347 = sbr.rel (%p345) target = $region24
        $region23: #{tpu_custom_call.1} parent=11 // pred_region
          %s349 = ssub.s32 2048, 2048
          %350 = vsyncadd [#allocation12], %s349
          %s351 = sshll.u32 [#allocation13], 4
          %s352 = int_to_ptr.vmem [resolvable:$true] %s351
          %357 = dma.hbm_to_vmem [thread:$0]  %s4, 2048, %s352, [#allocation12], 128, 128, 8
        $region24: #{tpu_custom_call.1} parent=11 // pred_fallthru
          _
        // Predicated region
        $region25: #{tpu_custom_call.1} parent=11 // pred_check
          %p358 = pneg %p164
        $region26: #{tpu_custom_call.1} parent=11 // pred_check_branch
          %360 = sbr.rel (%p358) target = $region28
        $region27: #{tpu_custom_call.1} parent=11 // pred_region
          %s362 = ssub.s32 2048, 2048
          %363 = vsyncadd [#allocation15], %s362
          %s364 = sshll.u32 [#allocation14], 4
          %s365 = int_to_ptr.vmem [resolvable:$true] %s364
          %370 = dma.hbm_to_vmem [thread:$0]  %s5, 2048, %s365, [#allocation15], 128, 128, 8
        $region28: #{tpu_custom_call.1} parent=11 // pred_fallthru
          _
        // Predicated region
        $region29: #{tpu_custom_call.1} parent=11 // pred_check
          %p371 = pneg %p185
        $region30: #{tpu_custom_call.1} parent=11 // pred_check_branch
          %373 = sbr.rel (%p371) target = $region32
        $region31: #{tpu_custom_call.1} parent=11 // pred_region
          %s375 = ssub.s32 2048, 2048
          %376 = vsyncadd [#allocation15], %s375
          %s377 = sshll.u32 [#allocation16], 4
          %s378 = int_to_ptr.vmem [resolvable:$true] %s377
          %383 = dma.hbm_to_vmem [thread:$0]  %s6, 2048, %s378, [#allocation15], 128, 128, 8
        $region32: #{tpu_custom_call.1} parent=11 // pred_fallthru
          _
        // Predicated region
        $region33: #{tpu_custom_call.1} parent=11 // pred_check
          %p384 = pneg %p206
        $region34: #{tpu_custom_call.1} parent=11 // pred_check_branch
          %386 = sbr.rel (%p384) target = $region36
        $region35: #{tpu_custom_call.1} parent=11 // pred_region
          %s388 = ssub.s32 2048, 2048
          %389 = vsyncadd [#allocation18], %s388
          %s390 = sshll.u32 [#allocation17], 4
          %s391 = int_to_ptr.vmem [resolvable:$true] %s390
          %396 = dma.hbm_to_vmem [thread:$0]  %s7, 2048, %s391, [#allocation18], 128, 128, 8
        $region36: #{tpu_custom_call.1} parent=11 // pred_fallthru
          _
        // Predicated region
        $region37: #{tpu_custom_call.1} parent=11 // pred_check
          %p397 = pneg %p227
        $region38: #{tpu_custom_call.1} parent=11 // pred_check_branch
          %399 = sbr.rel (%p397) target = $region40
        $region39: #{tpu_custom_call.1} parent=11 // pred_region
          %s401 = ssub.s32 2048, 2048
          %402 = vsyncadd [#allocation18], %s401
          %s403 = sshll.u32 [#allocation19], 4
          %s404 = int_to_ptr.vmem [resolvable:$true] %s403
          %409 = dma.hbm_to_vmem [thread:$0]  %s8, 2048, %s404, [#allocation18], 128, 128, 8
        $region40: #{tpu_custom_call.1} parent=11 // pred_fallthru
          _
        // Predicated region
        $region41: #{tpu_custom_call.1} parent=11 // pred_check
          %p410 = pneg %p248
        $region42: #{tpu_custom_call.1} parent=11 // pred_check_branch
          %412 = sbr.rel (%p410) target = $region44
        $region43: #{tpu_custom_call.1} parent=11 // pred_region
          %s414 = ssub.s32 2048, 2048
          %415 = vsyncadd [#allocation21], %s414
          %s416 = sshll.u32 [#allocation20], 4
          %s417 = int_to_ptr.vmem [resolvable:$true] %s416
          %422 = dma.hbm_to_vmem [thread:$0]  %s9, 2048, %s417, [#allocation21], 128, 128, 8
        $region44: #{tpu_custom_call.1} parent=11 // pred_fallthru
          _
        // Predicated region
        $region45: #{tpu_custom_call.1} parent=11 // pred_check
          %p423 = pneg %p269
        $region46: #{tpu_custom_call.1} parent=11 // pred_check_branch
          %425 = sbr.rel (%p423) target = $region48
        $region47: #{tpu_custom_call.1} parent=11 // pred_region
          _
        $region48: #{tpu_custom_call.1} parent=11 // pred_fallthru
          _
        // Predicated region
        $region49: #{tpu_custom_call.1} parent=11 // pred_check
          %p426 = pneg %p290
        $region50: #{tpu_custom_call.1} parent=11 // pred_check_branch
          %428 = sbr.rel (%p426) target = $region52
        $region51: #{tpu_custom_call.1} parent=11 // pred_region
          _
        $region52: #{tpu_custom_call.1} parent=11 // pred_fallthru
          _
      $region12: #{tpu_custom_call.1} parent=5 // pred_fallthru
        _
      %p429 = scmp.lt.s32.totalorder %s28, 2
      // Predicated region
      $region53: #{tpu_custom_call.1} parent=5 // pred_check
        %p430 = pneg %p429
      $region54: #{tpu_custom_call.1} parent=5 // pred_check_branch
        %432 = sbr.rel (%p430) target = $region56
      $region55: #{tpu_custom_call.1} parent=5 // pred_region
        // Predicated region
        $region57: #{tpu_custom_call.1} parent=55 // pred_check
          %p433 = pneg %p48
        $region58: #{tpu_custom_call.1} parent=55 // pred_check_branch
          %435 = sbr.rel (%p433) target = $region60
        $region59: #{tpu_custom_call.1} parent=55 // pred_region
          %s436 = sand.u32 %s38, 1
          %s437 = scalar_lea.sflag [#allocation9], %s436
          %s438 = sand.u32 %s38, 1
          %s439 = smul.addr %s438, 16
          %s440 = scalar_lea.vmem [#allocation8], %s439
          %s441 = smul.u32 2, %s28
          %s443 = ssub.s32 256, 256
          %444 = vsyncadd %s437, %s443
          %s445 = smul.addr %s441, 128
          %s446 = scalar_lea.hbm %s0, %s445
          %s447 = sshll.u32 %s440, 4
          %s448 = int_to_ptr.vmem [resolvable:$true] %s447
          %453 = dma.hbm_to_vmem [thread:$0]  %s446, 256, %s448, %s437, 128, 128, 8
        $region60: #{tpu_custom_call.1} parent=55 // pred_fallthru
          _
        // Predicated region
        $region61: #{tpu_custom_call.1} parent=55 // pred_check
          %p454 = pneg %p74
        $region62: #{tpu_custom_call.1} parent=55 // pred_check_branch
          %456 = sbr.rel (%p454) target = $region64
        $region63: #{tpu_custom_call.1} parent=55 // pred_region
          %p457 = scmp.lt.s32.totalorder %s28, 1
          %s458 = scalar_select %p457, %s28, 1
          %s459 = smul.addr %s458, 8
          %s460 = scalar_lea.vmem %s1, %s459
        $region64: #{tpu_custom_call.1} parent=55 // pred_fallthru
          _
      $region56: #{tpu_custom_call.1} parent=5 // pred_fallthru
        _
      %p461 = scmp.le.s32.totalorder 1, %s28
      %p462 = scmp.lt.s32.totalorder %s28, 3
      %p463 = pnand %p461, %p462
      %p464 = pneg %p463
      // Predicated region
      $region65: #{tpu_custom_call.1} parent=5 // pred_check
        _
      $region66: #{tpu_custom_call.1} parent=5 // pred_check_branch
        %466 = sbr.rel (%p463) target = $region68
      $region67: #{tpu_custom_call.1} parent=5 // pred_region
        %s467 = ssub.s32 %s28, 1
        %s468 = sand.u32 %s41, 1
        %s469 = scalar_lea.sflag [#allocation9], %s468
        %s470 = sand.u32 %s41, 1
        %s471 = smul.addr %s470, 16
        %s472 = scalar_lea.vmem [#allocation8], %s471
        // Predicated region
        $region69: #{tpu_custom_call.1} parent=67 // pred_check
          %p473 = pneg %p54
        $region70: #{tpu_custom_call.1} parent=67 // pred_check_branch
          %475 = sbr.rel (%p473) target = $region72
        $region71: #{tpu_custom_call.1} parent=67 // pred_region
          %476 = dma.done %s469, 256
        $region72: #{tpu_custom_call.1} parent=67 // pred_fallthru
          _
        // Predicated region
        $region73: #{tpu_custom_call.1} parent=67 // pred_check
          %p477 = pneg %p122
        $region74: #{tpu_custom_call.1} parent=67 // pred_check_branch
          %479 = sbr.rel (%p477) target = $region76
        $region75: #{tpu_custom_call.1} parent=67 // pred_region
          %480 = dma.done [#allocation12], 16
        $region76: #{tpu_custom_call.1} parent=67 // pred_fallthru
          _
        // Predicated region
        $region77: #{tpu_custom_call.1} parent=67 // pred_check
          %p481 = pneg %p143
        $region78: #{tpu_custom_call.1} parent=67 // pred_check_branch
          %483 = sbr.rel (%p481) target = $region80
        $region79: #{tpu_custom_call.1} parent=67 // pred_region
          %484 = dma.done [#allocation12], 2048
        $region80: #{tpu_custom_call.1} parent=67 // pred_fallthru
          _
        // Predicated region
        $region81: #{tpu_custom_call.1} parent=67 // pred_check
          %p485 = pneg %p164
        $region82: #{tpu_custom_call.1} parent=67 // pred_check_branch
          %487 = sbr.rel (%p485) target = $region84
        $region83: #{tpu_custom_call.1} parent=67 // pred_region
          %488 = dma.done [#allocation15], 2048
        $region84: #{tpu_custom_call.1} parent=67 // pred_fallthru
          _
        // Predicated region
        $region85: #{tpu_custom_call.1} parent=67 // pred_check
          %p489 = pneg %p185
        $region86: #{tpu_custom_call.1} parent=67 // pred_check_branch
          %491 = sbr.rel (%p489) target = $region88
        $region87: #{tpu_custom_call.1} parent=67 // pred_region
          %492 = dma.done [#allocation15], 2048
        $region88: #{tpu_custom_call.1} parent=67 // pred_fallthru
          _
        // Predicated region
        $region89: #{tpu_custom_call.1} parent=67 // pred_check
          %p493 = pneg %p206
        $region90: #{tpu_custom_call.1} parent=67 // pred_check_branch
          %495 = sbr.rel (%p493) target = $region92
        $region91: #{tpu_custom_call.1} parent=67 // pred_region
          %496 = dma.done [#allocation18], 2048
        $region92: #{tpu_custom_call.1} parent=67 // pred_fallthru
          _
        // Predicated region
        $region93: #{tpu_custom_call.1} parent=67 // pred_check
          %p497 = pneg %p227
        $region94: #{tpu_custom_call.1} parent=67 // pred_check_branch
          %499 = sbr.rel (%p497) target = $region96
        $region95: #{tpu_custom_call.1} parent=67 // pred_region
          %500 = dma.done [#allocation18], 2048
        $region96: #{tpu_custom_call.1} parent=67 // pred_fallthru
          _
        // Predicated region
        $region97: #{tpu_custom_call.1} parent=67 // pred_check
          %p501 = pneg %p248
        $region98: #{tpu_custom_call.1} parent=67 // pred_check_branch
          %503 = sbr.rel (%p501) target = $region100
        $region99: #{tpu_custom_call.1} parent=67 // pred_region
          %504 = dma.done [#allocation21], 2048
        $region100: #{tpu_custom_call.1} parent=67 // pred_fallthru
          _
        %s505 = sand.u32 %s41, 1
        %s506 = scalar_lea.sflag [#allocation9], %s505
        %s507 = sand.u32 %s41, 1
        %s508 = smul.addr %s507, 16
        %s509 = scalar_lea.vmem [#allocation8], %s508
        %p510 = pneg %p54
        %p511 = pneg %p51
        %p512 = scmp.lt.s32.totalorder %s33, 1
        %s513 = scalar_select %p512, %s33, 1
        %s514 = smul.addr %s513, 8
        %s515 = scalar_lea.vmem %s1, %s514
        %p516 = pneg %p80
        %p517 = pneg %p77
        %p518 = pneg %p101
        %p519 = pneg %p98
        %p520 = pneg %p122
        %p521 = pneg %p119
        %p522 = pneg %p143
        %p523 = pneg %p140
        %p524 = pneg %p164
        %p525 = pneg %p161
        %p526 = pneg %p185
        %p527 = pneg %p182
        %p528 = pneg %p206
        %p529 = pneg %p203
        %p530 = pneg %p227
        %p531 = pneg %p224
        %p532 = pneg %p248
        %p533 = pneg %p245
        %p534 = pneg %p269
        %p535 = pneg %p266
        %p536 = pneg %p290
        %p537 = pneg %p287
        %p538 = pneg %p316
        %p539 = pneg %p313
        %s540 = sand.u32 %s303, 1
        %s541 = scalar_lea.sflag [#allocation10], %s540
        %s542 = sand.u32 %s303, 1
        %s543 = smul.addr %s542, 16
        %s544 = scalar_lea.vmem [#allocation22], %s543
        %s545 = smul.u32 2, %s33
        %p546 = scmp.lt.s32.totalorder %s33, 1
        %s547 = scalar_select %p546, %s33, 1
        %s548 = smul.addr %s547, 8
        %s549 = scalar_lea.vmem %s1, %s548
        %s550 = smul.u32 2, %s33
        %v551 = vld [vmem:[%s10] sm:$0x1]
        %v552 = vld [vmem:[%s10 + $0x1] sm:$0x1]
        %v553 = vld [vmem:[%s10 + $0x2] sm:$0x1]
        %v554 = vld [vmem:[%s10 + $0x3] sm:$0x1]
        %v555 = vld [vmem:[%s11] sm:$0x1]
        %v556 = vld [vmem:[%s11 + $0x1] sm:$0x1]
        %v557 = vld [vmem:[%s11 + $0x2] sm:$0x1]
        %v558 = vld [vmem:[%s2] sm:$0xff]
        %v559 = vld [vmem:[%s2 + $0x8] sm:$0xff]
        %v560 = vld [vmem:[#allocation11] sm:$0x1]
        %v561 = vld [vmem:[%s472] sm:$0xff]
        %v562 = vld [vmem:[%s472 + $0x8] sm:$0xff]
        %v563 = vld [vmem:[#allocation13] sm:$0xff]
        %v564 = vld [vmem:[#allocation13 + $0x8] sm:$0xff]
        %v565 = vld [vmem:[#allocation13 + $0x10] sm:$0xff]
        %v566 = vld [vmem:[#allocation13 + $0x18] sm:$0xff]
        %v567 = vld [vmem:[#allocation13 + $0x20] sm:$0xff]
        %v568 = vld [vmem:[#allocation13 + $0x28] sm:$0xff]
        %v569 = vld [vmem:[#allocation13 + $0x30] sm:$0xff]
        %v570 = vld [vmem:[#allocation13 + $0x38] sm:$0xff]
        %v571 = vld [vmem:[#allocation13 + $0x40] sm:$0xff]
        %v572 = vld [vmem:[#allocation13 + $0x48] sm:$0xff]
        %v573 = vld [vmem:[#allocation13 + $0x50] sm:$0xff]
        %v574 = vld [vmem:[#allocation13 + $0x58] sm:$0xff]
        %v575 = vld [vmem:[#allocation13 + $0x60] sm:$0xff]
        %v576 = vld [vmem:[#allocation13 + $0x68] sm:$0xff]
        %v577 = vld [vmem:[#allocation13 + $0x70] sm:$0xff]
        %v578 = vld [vmem:[#allocation13 + $0x78] sm:$0xff]
        %v579 = vlaneseq
        %v580 = vshrl.u32 %v579, 7
        %v581 = vsub.s32 0, %v580
        %v582 = vrot.slane %v551, %v581
        %583 = vmatprep.subr.mxu0 0.0
        %584 = vmatpush1.msra.mxu0 %v578
        %585 = vmatprep.subr.mxu0 0.0
        %586 = vmatpush1.msra.mxu0 %v577
        %587 = vmatprep.subr.mxu0 0.0
        %588 = vmatpush1.msra.mxu0 %v576
        %589 = vmatprep.subr.mxu0 0.0
        %590 = vmatpush1.msra.mxu0 %v575
        %591 = vmatprep.subr.mxu0 0.0
        %592 = vmatpush1.msra.mxu0 %v574
        %593 = vmatprep.subr.mxu0 0.0
        %594 = vmatpush1.msra.mxu0 %v573
        %595 = vmatprep.subr.mxu0 0.0
        %596 = vmatpush1.msra.mxu0 %v572
        %597 = vmatprep.subr.mxu0 0.0
        %598 = vmatpush1.msra.mxu0 %v571
        %599 = vmatprep.subr.mxu0 0.0
        %600 = vmatpush1.msra.mxu0 %v570
        %601 = vmatprep.subr.mxu0 0.0
        %602 = vmatpush1.msra.mxu0 %v569
        %603 = vmatprep.subr.mxu0 0.0
        %604 = vmatpush1.msra.mxu0 %v568
        %605 = vmatprep.subr.mxu0 0.0
        %606 = vmatpush1.msra.mxu0 %v567
        %607 = vmatprep.subr.mxu0 0.0
        %608 = vmatpush1.msra.mxu0 %v566
        %609 = vmatprep.subr.mxu0 0.0
        %610 = vmatpush1.msra.mxu0 %v565
        %611 = vmatprep.subr.mxu0 0.0
        %612 = vmatpush1.msra.mxu0 %v564
        %613 = vmatprep.subr.mxu0 0.0
        %614 = vmatpush1.msra.mxu0 %v563
        %615 = vmatprep.subr.mxu0 0.0
        %616 = vmatpush2.msra.mxu0 0.0
        %617 = vmatprep.subr.mxu0 0.0
        %618 = vmatpush2.msra.mxu0 0.0
        %619 = vmatprep.subr.mxu0 0.0
        %620 = vmatpush2.msra.mxu0 0.0
        %621 = vmatprep.subr.mxu0 0.0
        %622 = vmatpush2.msra.mxu0 0.0
        %623 = vmatprep.subr.mxu0 0.0
        %624 = vmatpush2.msra.mxu0 0.0
        %625 = vmatprep.subr.mxu0 0.0
        %626 = vmatpush2.msra.mxu0 0.0
        %627 = vmatprep.subr.mxu0 0.0
        %628 = vmatpush2.msra.mxu0 0.0
        %629 = vmatprep.subr.mxu0 0.0
        %630 = vmatpush2.msra.mxu0 0.0
        %631 = vmatprep.subr.mxu0 0.0
        %632 = vmatpush2.msra.mxu0 0.0
        %633 = vmatprep.subr.mxu0 0.0
        %634 = vmatpush2.msra.mxu0 0.0
        %635 = vmatprep.subr.mxu0 0.0
        %636 = vmatpush2.msra.mxu0 0.0
        %637 = vmatprep.subr.mxu0 0.0
        %638 = vmatpush2.msra.mxu0 0.0
        %639 = vmatprep.subr.mxu0 0.0
        %640 = vmatpush2.msra.mxu0 0.0
        %641 = vmatprep.subr.mxu0 0.0
        %642 = vmatpush2.msra.mxu0 0.0
        %643 = vmatprep.subr.mxu0 0.0
        %644 = vmatpush2.msra.mxu0 0.0
        %645 = vmatprep.subr.mxu0 0.0
        %646 = vmatpush2.msra.mxu0 0.0
        %647 = vmatprep.mubr.f32.mxu0 0.0
        %648 = vmatmul.mubr.f32.gmra.mxu0 %v561
        %v649 = vpop.f32.mrf.mxu0
        %v650 = vadd.f32 %v582, %v649
        %v651 = vpop.f32.mrf.mxu0
        %652 = vmatprep.mubr.f32.mxu0 0.0
        %653 = vmatmul.mubr.f32.gmra.mxu0 %v562
        %v654 = vpop.f32.mrf.mxu0
        %v655 = vadd.f32 %v582, %v654
        %v656 = vpop.f32.mrf.mxu0
        %657 = vdwg.mxu0
        %vm658 = vcmask 130048
        %v660 = vsel %vm658, %v560, 0
        %662 = vmatprep.subr.mxu0 0.0
        %663 = vmatpush1.msra.mxu0 0.0
        %664 = vmatprep.subr.mxu0 0.0
        %665 = vmatpush1.msra.mxu0 0.0
        %666 = vmatprep.subr.mxu0 0.0
        %667 = vmatpush1.msra.mxu0 0.0
        %668 = vmatprep.subr.mxu0 0.0
        %669 = vmatpush1.msra.mxu0 0.0
        %670 = vmatprep.subr.mxu0 0.0
        %671 = vmatpush1.msra.mxu0 0.0
        %672 = vmatprep.subr.mxu0 0.0
        %673 = vmatpush1.msra.mxu0 0.0
        %674 = vmatprep.subr.mxu0 0.0
        %675 = vmatpush1.msra.mxu0 0.0
        %676 = vmatprep.subr.mxu0 0.0
        %677 = vmatpush1.msra.mxu0 0.0
        %678 = vmatprep.subr.mxu0 0.0
        %679 = vmatpush1.msra.mxu0 0.0
        %680 = vmatprep.subr.mxu0 0.0
        %681 = vmatpush1.msra.mxu0 0.0
        %682 = vmatprep.subr.mxu0 0.0
        %683 = vmatpush1.msra.mxu0 0.0
        %684 = vmatprep.subr.mxu0 0.0
        %685 = vmatpush1.msra.mxu0 0.0
        %686 = vmatprep.subr.mxu0 0.0
        %687 = vmatpush1.msra.mxu0 0.0
        %688 = vmatprep.subr.mxu0 0.0
        %689 = vmatpush1.msra.mxu0 0.0
        %690 = vmatprep.subr.mxu0 0.0
        %691 = vmatpush1.msra.mxu0 %v655
        %692 = vmatprep.subr.mxu0 0.0
        %693 = vmatpush1.msra.mxu0 %v650
        %694 = vmatprep.subr.mxu0 0.0
        %695 = vmatpush2.msra.mxu0 0.0
        %696 = vmatprep.subr.mxu0 0.0
        %697 = vmatpush2.msra.mxu0 0.0
        %698 = vmatprep.subr.mxu0 0.0
        %699 = vmatpush2.msra.mxu0 0.0
        %700 = vmatprep.subr.mxu0 0.0
        %701 = vmatpush2.msra.mxu0 0.0
        %702 = vmatprep.subr.mxu0 0.0
        %703 = vmatpush2.msra.mxu0 0.0
        %704 = vmatprep.subr.mxu0 0.0
        %705 = vmatpush2.msra.mxu0 0.0
        %706 = vmatprep.subr.mxu0 0.0
        %707 = vmatpush2.msra.mxu0 0.0
        %708 = vmatprep.subr.mxu0 0.0
        %709 = vmatpush2.msra.mxu0 0.0
        %710 = vmatprep.subr.mxu0 0.0
        %711 = vmatpush2.msra.mxu0 0.0
        %712 = vmatprep.subr.mxu0 0.0
        %713 = vmatpush2.msra.mxu0 0.0
        %714 = vmatprep.subr.mxu0 0.0
        %715 = vmatpush2.msra.mxu0 0.0
        %716 = vmatprep.subr.mxu0 0.0
        %717 = vmatpush2.msra.mxu0 0.0
        %718 = vmatprep.subr.mxu0 0.0
        %719 = vmatpush2.msra.mxu0 0.0
        %720 = vmatprep.subr.mxu0 0.0
        %721 = vmatpush2.msra.mxu0 0.0
        %722 = vmatprep.subr.mxu0 0.0
        %723 = vmatpush2.msra.mxu0 0.0
        %724 = vmatprep.subr.mxu0 0.0
        %725 = vmatpush2.msra.mxu0 0.0
        %726 = vmatprep.mubr.f32.mxu0 0.0
        %727 = vmatmul.mubr.f32.gmra.mxu0 %v660
        %v728 = vpop.f32.mrf.mxu0
        %v729 = vadd.f32 0.0, %v728
        %v730 = vpop.f32.mrf.mxu0
        %731 = vdwg.mxu0
        %vm732 = vcmask 7168
        %v734 = vsel %vm732, %v558, 0
        %v737 = vsel %vm732, %v559, 0
        %vm739 = vcmask 1040384
        %v741 = vsel %vm739, %v729, 0
        %743 = vmatprep.subr.mxu0 0.0
        %744 = vmatpush1.msra.mxu0 0.0
        %745 = vmatprep.subr.mxu0 0.0
        %746 = vmatpush1.msra.mxu0 0.0
        %747 = vmatprep.subr.mxu0 0.0
        %748 = vmatpush1.msra.mxu0 0.0
        %749 = vmatprep.subr.mxu0 0.0
        %750 = vmatpush1.msra.mxu0 0.0
        %751 = vmatprep.subr.mxu0 0.0
        %752 = vmatpush1.msra.mxu0 0.0
        %753 = vmatprep.subr.mxu0 0.0
        %754 = vmatpush1.msra.mxu0 0.0
        %755 = vmatprep.subr.mxu0 0.0
        %756 = vmatpush1.msra.mxu0 0.0
        %757 = vmatprep.subr.mxu0 0.0
        %758 = vmatpush1.msra.mxu0 0.0
        %759 = vmatprep.subr.mxu0 0.0
        %760 = vmatpush1.msra.mxu0 0.0
        %761 = vmatprep.subr.mxu0 0.0
        %762 = vmatpush1.msra.mxu0 0.0
        %763 = vmatprep.subr.mxu0 0.0
        %764 = vmatpush1.msra.mxu0 0.0
        %765 = vmatprep.subr.mxu0 0.0
        %766 = vmatpush1.msra.mxu0 0.0
        %767 = vmatprep.subr.mxu0 0.0
        %768 = vmatpush1.msra.mxu0 0.0
        %769 = vmatprep.subr.mxu0 0.0
        %770 = vmatpush1.msra.mxu0 0.0
        %771 = vmatprep.subr.mxu0 0.0
        %772 = vmatpush1.msra.mxu0 0.0
        %773 = vmatprep.subr.mxu0 0.0
        %774 = vmatpush1.msra.mxu0 %v741
        %775 = vmatprep.subr.mxu0 0.0
        %776 = vmatpush2.msra.mxu0 0.0
        %777 = vmatprep.subr.mxu0 0.0
        %778 = vmatpush2.msra.mxu0 0.0
        %779 = vmatprep.subr.mxu0 0.0
        %780 = vmatpush2.msra.mxu0 0.0
        %781 = vmatprep.subr.mxu0 0.0
        %782 = vmatpush2.msra.mxu0 0.0
        %783 = vmatprep.subr.mxu0 0.0
        %784 = vmatpush2.msra.mxu0 0.0
        %785 = vmatprep.subr.mxu0 0.0
        %786 = vmatpush2.msra.mxu0 0.0
        %787 = vmatprep.subr.mxu0 0.0
        %788 = vmatpush2.msra.mxu0 0.0
        %789 = vmatprep.subr.mxu0 0.0
        %790 = vmatpush2.msra.mxu0 0.0
        %791 = vmatprep.subr.mxu0 0.0
        %792 = vmatpush2.msra.mxu0 0.0
        %793 = vmatprep.subr.mxu0 0.0
        %794 = vmatpush2.msra.mxu0 0.0
        %795 = vmatprep.subr.mxu0 0.0
        %796 = vmatpush2.msra.mxu0 0.0
        %797 = vmatprep.subr.mxu0 0.0
        %798 = vmatpush2.msra.mxu0 0.0
        %799 = vmatprep.subr.mxu0 0.0
        %800 = vmatpush2.msra.mxu0 0.0
        %801 = vmatprep.subr.mxu0 0.0
        %802 = vmatpush2.msra.mxu0 0.0
        %803 = vmatprep.subr.mxu0 0.0
        %804 = vmatpush2.msra.mxu0 0.0
        %805 = vmatprep.subr.mxu0 0.0
        %806 = vmatpush2.msra.mxu0 0.0
        %807 = vmatprep.mubr.f32.mxu0 0.0
        %808 = vmatmul.mubr.f32.gmra.mxu0 %v734
        %v809 = vpop.f32.mrf.mxu0
        %v810 = vadd.f32 0.0, %v809
        %v811 = vpop.f32.mrf.mxu0
        %812 = vmatprep.mubr.f32.mxu0 0.0
        %813 = vmatmul.mubr.f32.gmra.mxu0 %v737
        %v814 = vpop.f32.mrf.mxu0
        %v815 = vadd.f32 0.0, %v814
        %v816 = vpop.f32.mrf.mxu0
        %817 = vdwg.mxu0
        %v818 = vsub.f32 %v650, %v810
        %v819 = vsub.f32 %v655, %v815
        %v820 = vmul.f32 %v818, %v818
        %v821 = vmul.f32 %v819, %v819
        %822 = vmatprep.subr.mxu0 0.0
        %823 = vmatpush1.msra.mxu0 0.0
        %824 = vmatprep.subr.mxu0 0.0
        %825 = vmatpush1.msra.mxu0 0.0
        %826 = vmatprep.subr.mxu0 0.0
        %827 = vmatpush1.msra.mxu0 0.0
        %828 = vmatprep.subr.mxu0 0.0
        %829 = vmatpush1.msra.mxu0 0.0
        %830 = vmatprep.subr.mxu0 0.0
        %831 = vmatpush1.msra.mxu0 0.0
        %832 = vmatprep.subr.mxu0 0.0
        %833 = vmatpush1.msra.mxu0 0.0
        %834 = vmatprep.subr.mxu0 0.0
        %835 = vmatpush1.msra.mxu0 0.0
        %836 = vmatprep.subr.mxu0 0.0
        %837 = vmatpush1.msra.mxu0 0.0
        %838 = vmatprep.subr.mxu0 0.0
        %839 = vmatpush1.msra.mxu0 0.0
        %840 = vmatprep.subr.mxu0 0.0
        %841 = vmatpush1.msra.mxu0 0.0
        %842 = vmatprep.subr.mxu0 0.0
        %843 = vmatpush1.msra.mxu0 0.0
        %844 = vmatprep.subr.mxu0 0.0
        %845 = vmatpush1.msra.mxu0 0.0
        %846 = vmatprep.subr.mxu0 0.0
        %847 = vmatpush1.msra.mxu0 0.0
        %848 = vmatprep.subr.mxu0 0.0
        %849 = vmatpush1.msra.mxu0 0.0
        %850 = vmatprep.subr.mxu0 0.0
        %851 = vmatpush1.msra.mxu0 %v821
        %852 = vmatprep.subr.mxu0 0.0
        %853 = vmatpush1.msra.mxu0 %v820
        %854 = vmatprep.subr.mxu0 0.0
        %855 = vmatpush2.msra.mxu0 0.0
        %856 = vmatprep.subr.mxu0 0.0
        %857 = vmatpush2.msra.mxu0 0.0
        %858 = vmatprep.subr.mxu0 0.0
        %859 = vmatpush2.msra.mxu0 0.0
        %860 = vmatprep.subr.mxu0 0.0
        %861 = vmatpush2.msra.mxu0 0.0
        %862 = vmatprep.subr.mxu0 0.0
        %863 = vmatpush2.msra.mxu0 0.0
        %864 = vmatprep.subr.mxu0 0.0
        %865 = vmatpush2.msra.mxu0 0.0
        %866 = vmatprep.subr.mxu0 0.0
        %867 = vmatpush2.msra.mxu0 0.0
        %868 = vmatprep.subr.mxu0 0.0
        %869 = vmatpush2.msra.mxu0 0.0
        %870 = vmatprep.subr.mxu0 0.0
        %871 = vmatpush2.msra.mxu0 0.0
        %872 = vmatprep.subr.mxu0 0.0
        %873 = vmatpush2.msra.mxu0 0.0
        %874 = vmatprep.subr.mxu0 0.0
        %875 = vmatpush2.msra.mxu0 0.0
        %876 = vmatprep.subr.mxu0 0.0
        %877 = vmatpush2.msra.mxu0 0.0
        %878 = vmatprep.subr.mxu0 0.0
        %879 = vmatpush2.msra.mxu0 0.0
        %880 = vmatprep.subr.mxu0 0.0
        %881 = vmatpush2.msra.mxu0 0.0
        %882 = vmatprep.subr.mxu0 0.0
        %883 = vmatpush2.msra.mxu0 0.0
        %884 = vmatprep.subr.mxu0 0.0
        %885 = vmatpush2.msra.mxu0 0.0
        %886 = vmatprep.mubr.f32.mxu0 0.0
        %887 = vmatmul.mubr.f32.gmra.mxu0 %v660
        %v888 = vpop.f32.mrf.mxu0
        %v889 = vadd.f32 0.0, %v888
        %v890 = vpop.f32.mrf.mxu0
        %891 = vdwg.mxu0
        %v893 = vsel %vm739, %v889, 0
        %895 = vmatprep.subr.mxu0 0.0
        %896 = vmatpush1.msra.mxu0 0.0
        %897 = vmatprep.subr.mxu0 0.0
        %898 = vmatpush1.msra.mxu0 0.0
        %899 = vmatprep.subr.mxu0 0.0
        %900 = vmatpush1.msra.mxu0 0.0
        %901 = vmatprep.subr.mxu0 0.0
        %902 = vmatpush1.msra.mxu0 0.0
        %903 = vmatprep.subr.mxu0 0.0
        %904 = vmatpush1.msra.mxu0 0.0
        %905 = vmatprep.subr.mxu0 0.0
        %906 = vmatpush1.msra.mxu0 0.0
        %907 = vmatprep.subr.mxu0 0.0
        %908 = vmatpush1.msra.mxu0 0.0
        %909 = vmatprep.subr.mxu0 0.0
        %910 = vmatpush1.msra.mxu0 0.0
        %911 = vmatprep.subr.mxu0 0.0
        %912 = vmatpush1.msra.mxu0 0.0
        %913 = vmatprep.subr.mxu0 0.0
        %914 = vmatpush1.msra.mxu0 0.0
        %915 = vmatprep.subr.mxu0 0.0
        %916 = vmatpush1.msra.mxu0 0.0
        %917 = vmatprep.subr.mxu0 0.0
        %918 = vmatpush1.msra.mxu0 0.0
        %919 = vmatprep.subr.mxu0 0.0
        %920 = vmatpush1.msra.mxu0 0.0
        %921 = vmatprep.subr.mxu0 0.0
        %922 = vmatpush1.msra.mxu0 0.0
        %923 = vmatprep.subr.mxu0 0.0
        %924 = vmatpush1.msra.mxu0 0.0
        %925 = vmatprep.subr.mxu0 0.0
        %926 = vmatpush1.msra.mxu0 %v893
        %927 = vmatprep.subr.mxu0 0.0
        %928 = vmatpush2.msra.mxu0 0.0
        %929 = vmatprep.subr.mxu0 0.0
        %930 = vmatpush2.msra.mxu0 0.0
        %931 = vmatprep.subr.mxu0 0.0
        %932 = vmatpush2.msra.mxu0 0.0
        %933 = vmatprep.subr.mxu0 0.0
        %934 = vmatpush2.msra.mxu0 0.0
        %935 = vmatprep.subr.mxu0 0.0
        %936 = vmatpush2.msra.mxu0 0.0
        %937 = vmatprep.subr.mxu0 0.0
        %938 = vmatpush2.msra.mxu0 0.0
        %939 = vmatprep.subr.mxu0 0.0
        %940 = vmatpush2.msra.mxu0 0.0
        %941 = vmatprep.subr.mxu0 0.0
        %942 = vmatpush2.msra.mxu0 0.0
        %943 = vmatprep.subr.mxu0 0.0
        %944 = vmatpush2.msra.mxu0 0.0
        %945 = vmatprep.subr.mxu0 0.0
        %946 = vmatpush2.msra.mxu0 0.0
        %947 = vmatprep.subr.mxu0 0.0
        %948 = vmatpush2.msra.mxu0 0.0
        %949 = vmatprep.subr.mxu0 0.0
        %950 = vmatpush2.msra.mxu0 0.0
        %951 = vmatprep.subr.mxu0 0.0
        %952 = vmatpush2.msra.mxu0 0.0
        %953 = vmatprep.subr.mxu0 0.0
        %954 = vmatpush2.msra.mxu0 0.0
        %955 = vmatprep.subr.mxu0 0.0
        %956 = vmatpush2.msra.mxu0 0.0
        %957 = vmatprep.subr.mxu0 0.0
        %958 = vmatpush2.msra.mxu0 0.0
        %959 = vmatprep.mubr.f32.mxu0 0.0
        %960 = vmatmul.mubr.f32.gmra.mxu0 %v734
        %v961 = vpop.f32.mrf.mxu0
        %v962 = vadd.f32 1e-05, %v961
        %v963 = vpop.f32.mrf.mxu0
        %964 = vmatprep.mubr.f32.mxu0 0.0
        %965 = vmatmul.mubr.f32.gmra.mxu0 %v737
        %v966 = vpop.f32.mrf.mxu0
        %v967 = vadd.f32 1e-05, %v966
        %v968 = vpop.f32.mrf.mxu0
        %969 = vdwg.mxu0
        %v970 = vrsqrt.pop %v962
        %v971 = vrsqrt.pop %v967
        %v972 = vmul.f32 %v818, %v970
        %v973 = vmul.f32 %v819, %v971
        %v974 = vlaneseq
        %v975 = vshrl.u32 %v974, 7
        %v976 = vsub.s32 0, %v975
        %v977 = vrot.slane %v552, %v976
        %v978 = vmul.f32 %v972, %v977
        %v979 = vmul.f32 %v973, %v977
        %v980 = vlaneseq
        %v981 = vshrl.u32 %v980, 7
        %v982 = vsub.s32 0, %v981
        %v983 = vrot.slane %v553, %v982
        %v984 = vadd.f32 %v978, %v983
        %v985 = vadd.f32 %v979, %v983
        %v986 = vld [vmem:[#allocation16] sm:$0xff]
        %v987 = vld [vmem:[#allocation16 + $0x8] sm:$0xff]
        %v988 = vld [vmem:[#allocation16 + $0x10] sm:$0xff]
        %v989 = vld [vmem:[#allocation16 + $0x18] sm:$0xff]
        %v990 = vld [vmem:[#allocation16 + $0x20] sm:$0xff]
        %v991 = vld [vmem:[#allocation16 + $0x28] sm:$0xff]
        %v992 = vld [vmem:[#allocation16 + $0x30] sm:$0xff]
        %v993 = vld [vmem:[#allocation16 + $0x38] sm:$0xff]
        %v994 = vld [vmem:[#allocation16 + $0x40] sm:$0xff]
        %v995 = vld [vmem:[#allocation16 + $0x48] sm:$0xff]
        %v996 = vld [vmem:[#allocation16 + $0x50] sm:$0xff]
        %v997 = vld [vmem:[#allocation16 + $0x58] sm:$0xff]
        %v998 = vld [vmem:[#allocation16 + $0x60] sm:$0xff]
        %v999 = vld [vmem:[#allocation16 + $0x68] sm:$0xff]
        %v1000 = vld [vmem:[#allocation16 + $0x70] sm:$0xff]
        %v1001 = vld [vmem:[#allocation16 + $0x78] sm:$0xff]
        %1002 = vmatprep.subr.mxu0 0.0
        %1003 = vmatpush1.msra.mxu0 %v1001
        %1004 = vmatprep.subr.mxu0 0.0
        %1005 = vmatpush1.msra.mxu0 %v1000
        %1006 = vmatprep.subr.mxu0 0.0
        %1007 = vmatpush1.msra.mxu0 %v999
        %1008 = vmatprep.subr.mxu0 0.0
        %1009 = vmatpush1.msra.mxu0 %v998
        %1010 = vmatprep.subr.mxu0 0.0
        %1011 = vmatpush1.msra.mxu0 %v997
        %1012 = vmatprep.subr.mxu0 0.0
        %1013 = vmatpush1.msra.mxu0 %v996
        %1014 = vmatprep.subr.mxu0 0.0
        %1015 = vmatpush1.msra.mxu0 %v995
        %1016 = vmatprep.subr.mxu0 0.0
        %1017 = vmatpush1.msra.mxu0 %v994
        %1018 = vmatprep.subr.mxu0 0.0
        %1019 = vmatpush1.msra.mxu0 %v993
        %1020 = vmatprep.subr.mxu0 0.0
        %1021 = vmatpush1.msra.mxu0 %v992
        %1022 = vmatprep.subr.mxu0 0.0
        %1023 = vmatpush1.msra.mxu0 %v991
        %1024 = vmatprep.subr.mxu0 0.0
        %1025 = vmatpush1.msra.mxu0 %v990
        %1026 = vmatprep.subr.mxu0 0.0
        %1027 = vmatpush1.msra.mxu0 %v989
        %1028 = vmatprep.subr.mxu0 0.0
        %1029 = vmatpush1.msra.mxu0 %v988
        %1030 = vmatprep.subr.mxu0 0.0
        %1031 = vmatpush1.msra.mxu0 %v987
        %1032 = vmatprep.subr.mxu0 0.0
        %1033 = vmatpush1.msra.mxu0 %v986
        %1034 = vmatprep.subr.mxu0 0.0
        %1035 = vmatpush2.msra.mxu0 0.0
        %1036 = vmatprep.subr.mxu0 0.0
        %1037 = vmatpush2.msra.mxu0 0.0
        %1038 = vmatprep.subr.mxu0 0.0
        %1039 = vmatpush2.msra.mxu0 0.0
        %1040 = vmatprep.subr.mxu0 0.0
        %1041 = vmatpush2.msra.mxu0 0.0
        %1042 = vmatprep.subr.mxu0 0.0
        %1043 = vmatpush2.msra.mxu0 0.0
        %1044 = vmatprep.subr.mxu0 0.0
        %1045 = vmatpush2.msra.mxu0 0.0
        %1046 = vmatprep.subr.mxu0 0.0
        %1047 = vmatpush2.msra.mxu0 0.0
        %1048 = vmatprep.subr.mxu0 0.0
        %1049 = vmatpush2.msra.mxu0 0.0
        %1050 = vmatprep.subr.mxu0 0.0
        %1051 = vmatpush2.msra.mxu0 0.0
        %1052 = vmatprep.subr.mxu0 0.0
        %1053 = vmatpush2.msra.mxu0 0.0
        %1054 = vmatprep.subr.mxu0 0.0
        %1055 = vmatpush2.msra.mxu0 0.0
        %1056 = vmatprep.subr.mxu0 0.0
        %1057 = vmatpush2.msra.mxu0 0.0
        %1058 = vmatprep.subr.mxu0 0.0
        %1059 = vmatpush2.msra.mxu0 0.0
        %1060 = vmatprep.subr.mxu0 0.0
        %1061 = vmatpush2.msra.mxu0 0.0
        %1062 = vmatprep.subr.mxu0 0.0
        %1063 = vmatpush2.msra.mxu0 0.0
        %1064 = vmatprep.subr.mxu0 0.0
        %1065 = vmatpush2.msra.mxu0 0.0
        %1066 = vmatprep.mubr.f32.mxu0 0.0
        %1067 = vmatmul.mubr.f32.gmra.mxu0 %v984
        %v1068 = vpop.f32.mrf.mxu0
        %v1069 = vadd.f32 0.0, %v1068
        %v1070 = vpop.f32.mrf.mxu0
        %1071 = vmatprep.mubr.f32.mxu0 0.0
        %1072 = vmatmul.mubr.f32.gmra.mxu0 %v985
        %v1073 = vpop.f32.mrf.mxu0
        %v1074 = vadd.f32 0.0, %v1073
        %v1075 = vpop.f32.mrf.mxu0
        %1076 = vdwg.mxu0
        %v1077 = vmul.f32 %v1069, 0.35355338
        %v1078 = vmul.f32 %v1074, 0.35355338
        %1079 = vst [vmem:[#allocation2] sm:$0xff] %v1077
        %1080 = vst [vmem:[#allocation2 + $0x8] sm:$0xff] %v1078
        %v1081 = vld [vmem:[#allocation17] sm:$0xff]
        %v1082 = vld [vmem:[#allocation17 + $0x8] sm:$0xff]
        %v1083 = vld [vmem:[#allocation17 + $0x10] sm:$0xff]
        %v1084 = vld [vmem:[#allocation17 + $0x18] sm:$0xff]
        %v1085 = vld [vmem:[#allocation17 + $0x20] sm:$0xff]
        %v1086 = vld [vmem:[#allocation17 + $0x28] sm:$0xff]
        %v1087 = vld [vmem:[#allocation17 + $0x30] sm:$0xff]
        %v1088 = vld [vmem:[#allocation17 + $0x38] sm:$0xff]
        %v1089 = vld [vmem:[#allocation17 + $0x40] sm:$0xff]
        %v1090 = vld [vmem:[#allocation17 + $0x48] sm:$0xff]
        %v1091 = vld [vmem:[#allocation17 + $0x50] sm:$0xff]
        %v1092 = vld [vmem:[#allocation17 + $0x58] sm:$0xff]
        %v1093 = vld [vmem:[#allocation17 + $0x60] sm:$0xff]
        %v1094 = vld [vmem:[#allocation17 + $0x68] sm:$0xff]
        %v1095 = vld [vmem:[#allocation17 + $0x70] sm:$0xff]
        %v1096 = vld [vmem:[#allocation17 + $0x78] sm:$0xff]
        %1097 = vmatprep.subr.mxu0 0.0
        %1098 = vmatpush1.msra.mxu0 %v1096
        %1099 = vmatprep.subr.mxu0 0.0
        %1100 = vmatpush1.msra.mxu0 %v1095
        %1101 = vmatprep.subr.mxu0 0.0
        %1102 = vmatpush1.msra.mxu0 %v1094
        %1103 = vmatprep.subr.mxu0 0.0
        %1104 = vmatpush1.msra.mxu0 %v1093
        %1105 = vmatprep.subr.mxu0 0.0
        %1106 = vmatpush1.msra.mxu0 %v1092
        %1107 = vmatprep.subr.mxu0 0.0
        %1108 = vmatpush1.msra.mxu0 %v1091
        %1109 = vmatprep.subr.mxu0 0.0
        %1110 = vmatpush1.msra.mxu0 %v1090
        %1111 = vmatprep.subr.mxu0 0.0
        %1112 = vmatpush1.msra.mxu0 %v1089
        %1113 = vmatprep.subr.mxu0 0.0
        %1114 = vmatpush1.msra.mxu0 %v1088
        %1115 = vmatprep.subr.mxu0 0.0
        %1116 = vmatpush1.msra.mxu0 %v1087
        %1117 = vmatprep.subr.mxu0 0.0
        %1118 = vmatpush1.msra.mxu0 %v1086
        %1119 = vmatprep.subr.mxu0 0.0
        %1120 = vmatpush1.msra.mxu0 %v1085
        %1121 = vmatprep.subr.mxu0 0.0
        %1122 = vmatpush1.msra.mxu0 %v1084
        %1123 = vmatprep.subr.mxu0 0.0
        %1124 = vmatpush1.msra.mxu0 %v1083
        %1125 = vmatprep.subr.mxu0 0.0
        %1126 = vmatpush1.msra.mxu0 %v1082
        %1127 = vmatprep.subr.mxu0 0.0
        %1128 = vmatpush1.msra.mxu0 %v1081
        %1129 = vmatprep.subr.mxu0 0.0
        %1130 = vmatpush2.msra.mxu0 0.0
        %1131 = vmatprep.subr.mxu0 0.0
        %1132 = vmatpush2.msra.mxu0 0.0
        %1133 = vmatprep.subr.mxu0 0.0
        %1134 = vmatpush2.msra.mxu0 0.0
        %1135 = vmatprep.subr.mxu0 0.0
        %1136 = vmatpush2.msra.mxu0 0.0
        %1137 = vmatprep.subr.mxu0 0.0
        %1138 = vmatpush2.msra.mxu0 0.0
        %1139 = vmatprep.subr.mxu0 0.0
        %1140 = vmatpush2.msra.mxu0 0.0
        %1141 = vmatprep.subr.mxu0 0.0
        %1142 = vmatpush2.msra.mxu0 0.0
        %1143 = vmatprep.subr.mxu0 0.0
        %1144 = vmatpush2.msra.mxu0 0.0
        %1145 = vmatprep.subr.mxu0 0.0
        %1146 = vmatpush2.msra.mxu0 0.0
        %1147 = vmatprep.subr.mxu0 0.0
        %1148 = vmatpush2.msra.mxu0 0.0
        %1149 = vmatprep.subr.mxu0 0.0
        %1150 = vmatpush2.msra.mxu0 0.0
        %1151 = vmatprep.subr.mxu0 0.0
        %1152 = vmatpush2.msra.mxu0 0.0
        %1153 = vmatprep.subr.mxu0 0.0
        %1154 = vmatpush2.msra.mxu0 0.0
        %1155 = vmatprep.subr.mxu0 0.0
        %1156 = vmatpush2.msra.mxu0 0.0
        %1157 = vmatprep.subr.mxu0 0.0
        %1158 = vmatpush2.msra.mxu0 0.0
        %1159 = vmatprep.subr.mxu0 0.0
        %1160 = vmatpush2.msra.mxu0 0.0
        %1161 = vmatprep.mubr.f32.mxu0 0.0
        %1162 = vmatmul.mubr.f32.gmra.mxu0 %v984
        %v1163 = vpop.f32.mrf.mxu0
        %v1164 = vadd.f32 0.0, %v1163
        %v1165 = vpop.f32.mrf.mxu0
        %1166 = vmatprep.mubr.f32.mxu0 0.0
        %1167 = vmatmul.mubr.f32.gmra.mxu0 %v985
        %v1168 = vpop.f32.mrf.mxu0
        %v1169 = vadd.f32 0.0, %v1168
        %v1170 = vpop.f32.mrf.mxu0
        %1171 = vdwg.mxu0
        %1172 = vst [vmem:[#allocation3] sm:$0xff] %v1164
        %1173 = vst [vmem:[#allocation3 + $0x8] sm:$0xff] %v1169
        %v1174 = vld [vmem:[#allocation19] sm:$0xff]
        %v1175 = vld [vmem:[#allocation19 + $0x8] sm:$0xff]
        %v1176 = vld [vmem:[#allocation19 + $0x10] sm:$0xff]
        %v1177 = vld [vmem:[#allocation19 + $0x18] sm:$0xff]
        %v1178 = vld [vmem:[#allocation19 + $0x20] sm:$0xff]
        %v1179 = vld [vmem:[#allocation19 + $0x28] sm:$0xff]
        %v1180 = vld [vmem:[#allocation19 + $0x30] sm:$0xff]
        %v1181 = vld [vmem:[#allocation19 + $0x38] sm:$0xff]
        %v1182 = vld [vmem:[#allocation19 + $0x40] sm:$0xff]
        %v1183 = vld [vmem:[#allocation19 + $0x48] sm:$0xff]
        %v1184 = vld [vmem:[#allocation19 + $0x50] sm:$0xff]
        %v1185 = vld [vmem:[#allocation19 + $0x58] sm:$0xff]
        %v1186 = vld [vmem:[#allocation19 + $0x60] sm:$0xff]
        %v1187 = vld [vmem:[#allocation19 + $0x68] sm:$0xff]
        %v1188 = vld [vmem:[#allocation19 + $0x70] sm:$0xff]
        %v1189 = vld [vmem:[#allocation19 + $0x78] sm:$0xff]
        %1190 = vmatprep.subr.mxu0 0.0
        %1191 = vmatpush1.msra.mxu0 %v1189
        %1192 = vmatprep.subr.mxu0 0.0
        %1193 = vmatpush1.msra.mxu0 %v1188
        %1194 = vmatprep.subr.mxu0 0.0
        %1195 = vmatpush1.msra.mxu0 %v1187
        %1196 = vmatprep.subr.mxu0 0.0
        %1197 = vmatpush1.msra.mxu0 %v1186
        %1198 = vmatprep.subr.mxu0 0.0
        %1199 = vmatpush1.msra.mxu0 %v1185
        %1200 = vmatprep.subr.mxu0 0.0
        %1201 = vmatpush1.msra.mxu0 %v1184
        %1202 = vmatprep.subr.mxu0 0.0
        %1203 = vmatpush1.msra.mxu0 %v1183
        %1204 = vmatprep.subr.mxu0 0.0
        %1205 = vmatpush1.msra.mxu0 %v1182
        %1206 = vmatprep.subr.mxu0 0.0
        %1207 = vmatpush1.msra.mxu0 %v1181
        %1208 = vmatprep.subr.mxu0 0.0
        %1209 = vmatpush1.msra.mxu0 %v1180
        %1210 = vmatprep.subr.mxu0 0.0
        %1211 = vmatpush1.msra.mxu0 %v1179
        %1212 = vmatprep.subr.mxu0 0.0
        %1213 = vmatpush1.msra.mxu0 %v1178
        %1214 = vmatprep.subr.mxu0 0.0
        %1215 = vmatpush1.msra.mxu0 %v1177
        %1216 = vmatprep.subr.mxu0 0.0
        %1217 = vmatpush1.msra.mxu0 %v1176
        %1218 = vmatprep.subr.mxu0 0.0
        %1219 = vmatpush1.msra.mxu0 %v1175
        %1220 = vmatprep.subr.mxu0 0.0
        %1221 = vmatpush1.msra.mxu0 %v1174
        %1222 = vmatprep.subr.mxu0 0.0
        %1223 = vmatpush2.msra.mxu0 0.0
        %1224 = vmatprep.subr.mxu0 0.0
        %1225 = vmatpush2.msra.mxu0 0.0
        %1226 = vmatprep.subr.mxu0 0.0
        %1227 = vmatpush2.msra.mxu0 0.0
        %1228 = vmatprep.subr.mxu0 0.0
        %1229 = vmatpush2.msra.mxu0 0.0
        %1230 = vmatprep.subr.mxu0 0.0
        %1231 = vmatpush2.msra.mxu0 0.0
        %1232 = vmatprep.subr.mxu0 0.0
        %1233 = vmatpush2.msra.mxu0 0.0
        %1234 = vmatprep.subr.mxu0 0.0
        %1235 = vmatpush2.msra.mxu0 0.0
        %1236 = vmatprep.subr.mxu0 0.0
        %1237 = vmatpush2.msra.mxu0 0.0
        %1238 = vmatprep.subr.mxu0 0.0
        %1239 = vmatpush2.msra.mxu0 0.0
        %1240 = vmatprep.subr.mxu0 0.0
        %1241 = vmatpush2.msra.mxu0 0.0
        %1242 = vmatprep.subr.mxu0 0.0
        %1243 = vmatpush2.msra.mxu0 0.0
        %1244 = vmatprep.subr.mxu0 0.0
        %1245 = vmatpush2.msra.mxu0 0.0
        %1246 = vmatprep.subr.mxu0 0.0
        %1247 = vmatpush2.msra.mxu0 0.0
        %1248 = vmatprep.subr.mxu0 0.0
        %1249 = vmatpush2.msra.mxu0 0.0
        %1250 = vmatprep.subr.mxu0 0.0
        %1251 = vmatpush2.msra.mxu0 0.0
        %1252 = vmatprep.subr.mxu0 0.0
        %1253 = vmatpush2.msra.mxu0 0.0
        %1254 = vmatprep.mubr.f32.mxu0 0.0
        %1255 = vmatmul.mubr.f32.gmra.mxu0 %v984
        %v1256 = vpop.f32.mrf.mxu0
        %v1257 = vadd.f32 0.0, %v1256
        %v1258 = vpop.f32.mrf.mxu0
        %1259 = vmatprep.mubr.f32.mxu0 0.0
        %1260 = vmatmul.mubr.f32.gmra.mxu0 %v985
        %v1261 = vpop.f32.mrf.mxu0
        %v1262 = vadd.f32 0.0, %v1261
        %v1263 = vpop.f32.mrf.mxu0
        %1264 = vdwg.mxu0
        %1265 = vst [vmem:[#allocation4] sm:$0xff] %v1257
        %1266 = vst [vmem:[#allocation4 + $0x8] sm:$0xff] %v1262
        %v1267 = vld [vmem:[%s549] sm:$0xff]
        %v1268 = vld [vmem:[#allocation14] sm:$0xff]
        %v1269 = vld [vmem:[#allocation14 + $0x8] sm:$0xff]
        %v1270 = vld [vmem:[#allocation14 + $0x10] sm:$0xff]
        %v1271 = vld [vmem:[#allocation14 + $0x18] sm:$0xff]
        %v1272 = vld [vmem:[#allocation14 + $0x20] sm:$0xff]
        %v1273 = vld [vmem:[#allocation14 + $0x28] sm:$0xff]
        %v1274 = vld [vmem:[#allocation14 + $0x30] sm:$0xff]
        %v1275 = vld [vmem:[#allocation14 + $0x38] sm:$0xff]
        %v1276 = vld [vmem:[#allocation14 + $0x40] sm:$0xff]
        %v1277 = vld [vmem:[#allocation14 + $0x48] sm:$0xff]
        %v1278 = vld [vmem:[#allocation14 + $0x50] sm:$0xff]
        %v1279 = vld [vmem:[#allocation14 + $0x58] sm:$0xff]
        %v1280 = vld [vmem:[#allocation14 + $0x60] sm:$0xff]
        %v1281 = vld [vmem:[#allocation14 + $0x68] sm:$0xff]
        %v1282 = vld [vmem:[#allocation14 + $0x70] sm:$0xff]
        %v1283 = vld [vmem:[#allocation14 + $0x78] sm:$0xff]
        %v1284 = vlaneseq
        %v1285 = vshrl.u32 %v1284, 7
        %v1286 = vsub.s32 0, %v1285
        %v1287 = vrot.slane %v554, %v1286
        %1288 = vmatprep.subr.mxu0 0.0
        %1289 = vmatpush1.msra.mxu0 %v1283
        %1290 = vmatprep.subr.mxu0 0.0
        %1291 = vmatpush1.msra.mxu0 %v1282
        %1292 = vmatprep.subr.mxu0 0.0
        %1293 = vmatpush1.msra.mxu0 %v1281
        %1294 = vmatprep.subr.mxu0 0.0
        %1295 = vmatpush1.msra.mxu0 %v1280
        %1296 = vmatprep.subr.mxu0 0.0
        %1297 = vmatpush1.msra.mxu0 %v1279
        %1298 = vmatprep.subr.mxu0 0.0
        %1299 = vmatpush1.msra.mxu0 %v1278
        %1300 = vmatprep.subr.mxu0 0.0
        %1301 = vmatpush1.msra.mxu0 %v1277
        %1302 = vmatprep.subr.mxu0 0.0
        %1303 = vmatpush1.msra.mxu0 %v1276
        %1304 = vmatprep.subr.mxu0 0.0
        %1305 = vmatpush1.msra.mxu0 %v1275
        %1306 = vmatprep.subr.mxu0 0.0
        %1307 = vmatpush1.msra.mxu0 %v1274
        %1308 = vmatprep.subr.mxu0 0.0
        %1309 = vmatpush1.msra.mxu0 %v1273
        %1310 = vmatprep.subr.mxu0 0.0
        %1311 = vmatpush1.msra.mxu0 %v1272
        %1312 = vmatprep.subr.mxu0 0.0
        %1313 = vmatpush1.msra.mxu0 %v1271
        %1314 = vmatprep.subr.mxu0 0.0
        %1315 = vmatpush1.msra.mxu0 %v1270
        %1316 = vmatprep.subr.mxu0 0.0
        %1317 = vmatpush1.msra.mxu0 %v1269
        %1318 = vmatprep.subr.mxu0 0.0
        %1319 = vmatpush1.msra.mxu0 %v1268
        %1320 = vmatprep.subr.mxu0 0.0
        %1321 = vmatpush2.msra.mxu0 0.0
        %1322 = vmatprep.subr.mxu0 0.0
        %1323 = vmatpush2.msra.mxu0 0.0
        %1324 = vmatprep.subr.mxu0 0.0
        %1325 = vmatpush2.msra.mxu0 0.0
        %1326 = vmatprep.subr.mxu0 0.0
        %1327 = vmatpush2.msra.mxu0 0.0
        %1328 = vmatprep.subr.mxu0 0.0
        %1329 = vmatpush2.msra.mxu0 0.0
        %1330 = vmatprep.subr.mxu0 0.0
        %1331 = vmatpush2.msra.mxu0 0.0
        %1332 = vmatprep.subr.mxu0 0.0
        %1333 = vmatpush2.msra.mxu0 0.0
        %1334 = vmatprep.subr.mxu0 0.0
        %1335 = vmatpush2.msra.mxu0 0.0
        %1336 = vmatprep.subr.mxu0 0.0
        %1337 = vmatpush2.msra.mxu0 0.0
        %1338 = vmatprep.subr.mxu0 0.0
        %1339 = vmatpush2.msra.mxu0 0.0
        %1340 = vmatprep.subr.mxu0 0.0
        %1341 = vmatpush2.msra.mxu0 0.0
        %1342 = vmatprep.subr.mxu0 0.0
        %1343 = vmatpush2.msra.mxu0 0.0
        %1344 = vmatprep.subr.mxu0 0.0
        %1345 = vmatpush2.msra.mxu0 0.0
        %1346 = vmatprep.subr.mxu0 0.0
        %1347 = vmatpush2.msra.mxu0 0.0
        %1348 = vmatprep.subr.mxu0 0.0
        %1349 = vmatpush2.msra.mxu0 0.0
        %1350 = vmatprep.subr.mxu0 0.0
        %1351 = vmatpush2.msra.mxu0 0.0
        %1352 = vmatprep.mubr.f32.mxu0 0.0
        %1353 = vmatmul.mubr.f32.gmra.mxu0 %v1267
        %v1354 = vpop.f32.mrf.mxu0
        %v1355 = vadd.f32 %v1287, %v1354
        %v1356 = vpop.f32.mrf.mxu0
        %1357 = vdwg.mxu0
        %v1358 = vld [vmem:[#allocation17] sm:$0xff]
        %v1359 = vld [vmem:[#allocation17 + $0x8] sm:$0xff]
        %v1360 = vld [vmem:[#allocation17 + $0x10] sm:$0xff]
        %v1361 = vld [vmem:[#allocation17 + $0x18] sm:$0xff]
        %v1362 = vld [vmem:[#allocation17 + $0x20] sm:$0xff]
        %v1363 = vld [vmem:[#allocation17 + $0x28] sm:$0xff]
        %v1364 = vld [vmem:[#allocation17 + $0x30] sm:$0xff]
        %v1365 = vld [vmem:[#allocation17 + $0x38] sm:$0xff]
        %v1366 = vld [vmem:[#allocation17 + $0x40] sm:$0xff]
        %v1367 = vld [vmem:[#allocation17 + $0x48] sm:$0xff]
        %v1368 = vld [vmem:[#allocation17 + $0x50] sm:$0xff]
        %v1369 = vld [vmem:[#allocation17 + $0x58] sm:$0xff]
        %v1370 = vld [vmem:[#allocation17 + $0x60] sm:$0xff]
        %v1371 = vld [vmem:[#allocation17 + $0x68] sm:$0xff]
        %v1372 = vld [vmem:[#allocation17 + $0x70] sm:$0xff]
        %v1373 = vld [vmem:[#allocation17 + $0x78] sm:$0xff]
        %1374 = vmatprep.subr.mxu0 0.0
        %1375 = vmatpush1.msra.mxu0 %v1373
        %1376 = vmatprep.subr.mxu0 0.0
        %1377 = vmatpush1.msra.mxu0 %v1372
        %1378 = vmatprep.subr.mxu0 0.0
        %1379 = vmatpush1.msra.mxu0 %v1371
        %1380 = vmatprep.subr.mxu0 0.0
        %1381 = vmatpush1.msra.mxu0 %v1370
        %1382 = vmatprep.subr.mxu0 0.0
        %1383 = vmatpush1.msra.mxu0 %v1369
        %1384 = vmatprep.subr.mxu0 0.0
        %1385 = vmatpush1.msra.mxu0 %v1368
        %1386 = vmatprep.subr.mxu0 0.0
        %1387 = vmatpush1.msra.mxu0 %v1367
        %1388 = vmatprep.subr.mxu0 0.0
        %1389 = vmatpush1.msra.mxu0 %v1366
        %1390 = vmatprep.subr.mxu0 0.0
        %1391 = vmatpush1.msra.mxu0 %v1365
        %1392 = vmatprep.subr.mxu0 0.0
        %1393 = vmatpush1.msra.mxu0 %v1364
        %1394 = vmatprep.subr.mxu0 0.0
        %1395 = vmatpush1.msra.mxu0 %v1363
        %1396 = vmatprep.subr.mxu0 0.0
        %1397 = vmatpush1.msra.mxu0 %v1362
        %1398 = vmatprep.subr.mxu0 0.0
        %1399 = vmatpush1.msra.mxu0 %v1361
        %1400 = vmatprep.subr.mxu0 0.0
        %1401 = vmatpush1.msra.mxu0 %v1360
        %1402 = vmatprep.subr.mxu0 0.0
        %1403 = vmatpush1.msra.mxu0 %v1359
        %1404 = vmatprep.subr.mxu0 0.0
        %1405 = vmatpush1.msra.mxu0 %v1358
        %1406 = vmatprep.subr.mxu0 0.0
        %1407 = vmatpush2.msra.mxu0 0.0
        %1408 = vmatprep.subr.mxu0 0.0
        %1409 = vmatpush2.msra.mxu0 0.0
        %1410 = vmatprep.subr.mxu0 0.0
        %1411 = vmatpush2.msra.mxu0 0.0
        %1412 = vmatprep.subr.mxu0 0.0
        %1413 = vmatpush2.msra.mxu0 0.0
        %1414 = vmatprep.subr.mxu0 0.0
        %1415 = vmatpush2.msra.mxu0 0.0
        %1416 = vmatprep.subr.mxu0 0.0
        %1417 = vmatpush2.msra.mxu0 0.0
        %1418 = vmatprep.subr.mxu0 0.0
        %1419 = vmatpush2.msra.mxu0 0.0
        %1420 = vmatprep.subr.mxu0 0.0
        %1421 = vmatpush2.msra.mxu0 0.0
        %1422 = vmatprep.subr.mxu0 0.0
        %1423 = vmatpush2.msra.mxu0 0.0
        %1424 = vmatprep.subr.mxu0 0.0
        %1425 = vmatpush2.msra.mxu0 0.0
        %1426 = vmatprep.subr.mxu0 0.0
        %1427 = vmatpush2.msra.mxu0 0.0
        %1428 = vmatprep.subr.mxu0 0.0
        %1429 = vmatpush2.msra.mxu0 0.0
        %1430 = vmatprep.subr.mxu0 0.0
        %1431 = vmatpush2.msra.mxu0 0.0
        %1432 = vmatprep.subr.mxu0 0.0
        %1433 = vmatpush2.msra.mxu0 0.0
        %1434 = vmatprep.subr.mxu0 0.0
        %1435 = vmatpush2.msra.mxu0 0.0
        %1436 = vmatprep.subr.mxu0 0.0
        %1437 = vmatpush2.msra.mxu0 0.0
        %1438 = vmatprep.mubr.f32.mxu0 0.0
        %1439 = vmatmul.mubr.f32.gmra.mxu0 %v1355
        %v1440 = vpop.f32.mrf.mxu0
        %v1441 = vadd.f32 0.0, %v1440
        %v1442 = vpop.f32.mrf.mxu0
        %1443 = vdwg.mxu0
        %1444 = vst [vmem:[#allocation5] sm:$0xff] %v1441
        %v1445 = vld [vmem:[#allocation19] sm:$0xff]
        %v1446 = vld [vmem:[#allocation19 + $0x8] sm:$0xff]
        %v1447 = vld [vmem:[#allocation19 + $0x10] sm:$0xff]
        %v1448 = vld [vmem:[#allocation19 + $0x18] sm:$0xff]
        %v1449 = vld [vmem:[#allocation19 + $0x20] sm:$0xff]
        %v1450 = vld [vmem:[#allocation19 + $0x28] sm:$0xff]
        %v1451 = vld [vmem:[#allocation19 + $0x30] sm:$0xff]
        %v1452 = vld [vmem:[#allocation19 + $0x38] sm:$0xff]
        %v1453 = vld [vmem:[#allocation19 + $0x40] sm:$0xff]
        %v1454 = vld [vmem:[#allocation19 + $0x48] sm:$0xff]
        %v1455 = vld [vmem:[#allocation19 + $0x50] sm:$0xff]
        %v1456 = vld [vmem:[#allocation19 + $0x58] sm:$0xff]
        %v1457 = vld [vmem:[#allocation19 + $0x60] sm:$0xff]
        %v1458 = vld [vmem:[#allocation19 + $0x68] sm:$0xff]
        %v1459 = vld [vmem:[#allocation19 + $0x70] sm:$0xff]
        %v1460 = vld [vmem:[#allocation19 + $0x78] sm:$0xff]
        %1461 = vmatprep.subr.mxu0 0.0
        %1462 = vmatpush1.msra.mxu0 %v1460
        %1463 = vmatprep.subr.mxu0 0.0
        %1464 = vmatpush1.msra.mxu0 %v1459
        %1465 = vmatprep.subr.mxu0 0.0
        %1466 = vmatpush1.msra.mxu0 %v1458
        %1467 = vmatprep.subr.mxu0 0.0
        %1468 = vmatpush1.msra.mxu0 %v1457
        %1469 = vmatprep.subr.mxu0 0.0
        %1470 = vmatpush1.msra.mxu0 %v1456
        %1471 = vmatprep.subr.mxu0 0.0
        %1472 = vmatpush1.msra.mxu0 %v1455
        %1473 = vmatprep.subr.mxu0 0.0
        %1474 = vmatpush1.msra.mxu0 %v1454
        %1475 = vmatprep.subr.mxu0 0.0
        %1476 = vmatpush1.msra.mxu0 %v1453
        %1477 = vmatprep.subr.mxu0 0.0
        %1478 = vmatpush1.msra.mxu0 %v1452
        %1479 = vmatprep.subr.mxu0 0.0
        %1480 = vmatpush1.msra.mxu0 %v1451
        %1481 = vmatprep.subr.mxu0 0.0
        %1482 = vmatpush1.msra.mxu0 %v1450
        %1483 = vmatprep.subr.mxu0 0.0
        %1484 = vmatpush1.msra.mxu0 %v1449
        %1485 = vmatprep.subr.mxu0 0.0
        %1486 = vmatpush1.msra.mxu0 %v1448
        %1487 = vmatprep.subr.mxu0 0.0
        %1488 = vmatpush1.msra.mxu0 %v1447
        %1489 = vmatprep.subr.mxu0 0.0
        %1490 = vmatpush1.msra.mxu0 %v1446
        %1491 = vmatprep.subr.mxu0 0.0
        %1492 = vmatpush1.msra.mxu0 %v1445
        %1493 = vmatprep.subr.mxu0 0.0
        %1494 = vmatpush2.msra.mxu0 0.0
        %1495 = vmatprep.subr.mxu0 0.0
        %1496 = vmatpush2.msra.mxu0 0.0
        %1497 = vmatprep.subr.mxu0 0.0
        %1498 = vmatpush2.msra.mxu0 0.0
        %1499 = vmatprep.subr.mxu0 0.0
        %1500 = vmatpush2.msra.mxu0 0.0
        %1501 = vmatprep.subr.mxu0 0.0
        %1502 = vmatpush2.msra.mxu0 0.0
        %1503 = vmatprep.subr.mxu0 0.0
        %1504 = vmatpush2.msra.mxu0 0.0
        %1505 = vmatprep.subr.mxu0 0.0
        %1506 = vmatpush2.msra.mxu0 0.0
        %1507 = vmatprep.subr.mxu0 0.0
        %1508 = vmatpush2.msra.mxu0 0.0
        %1509 = vmatprep.subr.mxu0 0.0
        %1510 = vmatpush2.msra.mxu0 0.0
        %1511 = vmatprep.subr.mxu0 0.0
        %1512 = vmatpush2.msra.mxu0 0.0
        %1513 = vmatprep.subr.mxu0 0.0
        %1514 = vmatpush2.msra.mxu0 0.0
        %1515 = vmatprep.subr.mxu0 0.0
        %1516 = vmatpush2.msra.mxu0 0.0
        %1517 = vmatprep.subr.mxu0 0.0
        %1518 = vmatpush2.msra.mxu0 0.0
        %1519 = vmatprep.subr.mxu0 0.0
        %1520 = vmatpush2.msra.mxu0 0.0
        %1521 = vmatprep.subr.mxu0 0.0
        %1522 = vmatpush2.msra.mxu0 0.0
        %1523 = vmatprep.subr.mxu0 0.0
        %1524 = vmatpush2.msra.mxu0 0.0
        %1525 = vmatprep.mubr.f32.mxu0 0.0
        %1526 = vmatmul.mubr.f32.gmra.mxu0 %v1355
        %v1527 = vpop.f32.mrf.mxu0
        %v1528 = vadd.f32 0.0, %v1527
        %v1529 = vpop.f32.mrf.mxu0
        %1530 = vdwg.mxu0
        %1531 = vst [vmem:[#allocation6] sm:$0xff] %v1528
        %v1532 = vld [vmem:[#allocation2] sm:$0xff]
        %v1533 = vld [vmem:[#allocation2 + $0x8] sm:$0xff]
        %v1534 = vld [vmem:[#allocation3] sm:$0xff]
        %v1535 = vld [vmem:[#allocation3 + $0x8] sm:$0xff]
        %1536 = vmatprep.subr.mxu0 0.0
        %1537 = vmatpush1.xpose.msra.mxu0 0.0
        %1538 = vmatprep.subr.mxu0 0.0
        %1539 = vmatpush1.xpose.msra.mxu0 0.0
        %1540 = vmatprep.subr.mxu0 0.0
        %1541 = vmatpush1.xpose.msra.mxu0 0.0
        %1542 = vmatprep.subr.mxu0 0.0
        %1543 = vmatpush1.xpose.msra.mxu0 0.0
        %1544 = vmatprep.subr.mxu0 0.0
        %1545 = vmatpush1.xpose.msra.mxu0 0.0
        %1546 = vmatprep.subr.mxu0 0.0
        %1547 = vmatpush1.xpose.msra.mxu0 0.0
        %1548 = vmatprep.subr.mxu0 0.0
        %1549 = vmatpush1.xpose.msra.mxu0 0.0
        %1550 = vmatprep.subr.mxu0 0.0
        %1551 = vmatpush1.xpose.msra.mxu0 0.0
        %1552 = vmatprep.subr.mxu0 0.0
        %1553 = vmatpush1.xpose.msra.mxu0 0.0
        %1554 = vmatprep.subr.mxu0 0.0
        %1555 = vmatpush1.xpose.msra.mxu0 0.0
        %1556 = vmatprep.subr.mxu0 0.0
        %1557 = vmatpush1.xpose.msra.mxu0 0.0
        %1558 = vmatprep.subr.mxu0 0.0
        %1559 = vmatpush1.xpose.msra.mxu0 0.0
        %1560 = vmatprep.subr.mxu0 0.0
        %1561 = vmatpush1.xpose.msra.mxu0 0.0
        %1562 = vmatprep.subr.mxu0 0.0
        %1563 = vmatpush1.xpose.msra.mxu0 0.0
        %1564 = vmatprep.subr.mxu0 0.0
        %1565 = vmatpush1.xpose.msra.mxu0 %v1535
        %1566 = vmatprep.subr.mxu0 0.0
        %1567 = vmatpush1.xpose.msra.mxu0 %v1534
        %1568 = vmatprep.subr.mxu0 0.0
        %1569 = vmatpush2.xpose.msra.mxu0 0.0
        %1570 = vmatprep.subr.mxu0 0.0
        %1571 = vmatpush2.xpose.msra.mxu0 0.0
        %1572 = vmatprep.subr.mxu0 0.0
        %1573 = vmatpush2.xpose.msra.mxu0 0.0
        %1574 = vmatprep.subr.mxu0 0.0
        %1575 = vmatpush2.xpose.msra.mxu0 0.0
        %1576 = vmatprep.subr.mxu0 0.0
        %1577 = vmatpush2.xpose.msra.mxu0 0.0
        %1578 = vmatprep.subr.mxu0 0.0
        %1579 = vmatpush2.xpose.msra.mxu0 0.0
        %1580 = vmatprep.subr.mxu0 0.0
        %1581 = vmatpush2.xpose.msra.mxu0 0.0
        %1582 = vmatprep.subr.mxu0 0.0
        %1583 = vmatpush2.xpose.msra.mxu0 0.0
        %1584 = vmatprep.subr.mxu0 0.0
        %1585 = vmatpush2.xpose.msra.mxu0 0.0
        %1586 = vmatprep.subr.mxu0 0.0
        %1587 = vmatpush2.xpose.msra.mxu0 0.0
        %1588 = vmatprep.subr.mxu0 0.0
        %1589 = vmatpush2.xpose.msra.mxu0 0.0
        %1590 = vmatprep.subr.mxu0 0.0
        %1591 = vmatpush2.xpose.msra.mxu0 0.0
        %1592 = vmatprep.subr.mxu0 0.0
        %1593 = vmatpush2.xpose.msra.mxu0 0.0
        %1594 = vmatprep.subr.mxu0 0.0
        %1595 = vmatpush2.xpose.msra.mxu0 0.0
        %1596 = vmatprep.subr.mxu0 0.0
        %1597 = vmatpush2.xpose.msra.mxu0 0.0
        %1598 = vmatprep.subr.mxu0 0.0
        %1599 = vmatpush2.xpose.msra.mxu0 0.0
        %1600 = vmatprep.mubr.f32.mxu0 0.0
        %1601 = vmatmul.mubr.f32.gmra.mxu0 %v1532
        %v1602 = vpop.f32.mrf.mxu0
        %v1603 = vadd.f32 0.0, %v1602
        %v1604 = vpop.f32.mrf.mxu0
        %1605 = vmatprep.mubr.f32.mxu0 0.0
        %1606 = vmatmul.mubr.f32.gmra.mxu0 %v1533
        %v1607 = vpop.f32.mrf.mxu0
        %v1608 = vadd.f32 0.0, %v1607
        %v1609 = vpop.f32.mrf.mxu0
        %1610 = vdwg.mxu0
        %v1611 = vld [vmem:[#allocation5] sm:$0xff]
        %1612 = vmatprep.subr.mxu0 0.0
        %1613 = vmatpush1.xpose.msra.mxu0 0.0
        %1614 = vmatprep.subr.mxu0 0.0
        %1615 = vmatpush1.xpose.msra.mxu0 0.0
        %1616 = vmatprep.subr.mxu0 0.0
        %1617 = vmatpush1.xpose.msra.mxu0 0.0
        %1618 = vmatprep.subr.mxu0 0.0
        %1619 = vmatpush1.xpose.msra.mxu0 0.0
        %1620 = vmatprep.subr.mxu0 0.0
        %1621 = vmatpush1.xpose.msra.mxu0 0.0
        %1622 = vmatprep.subr.mxu0 0.0
        %1623 = vmatpush1.xpose.msra.mxu0 0.0
        %1624 = vmatprep.subr.mxu0 0.0
        %1625 = vmatpush1.xpose.msra.mxu0 0.0
        %1626 = vmatprep.subr.mxu0 0.0
        %1627 = vmatpush1.xpose.msra.mxu0 0.0
        %1628 = vmatprep.subr.mxu0 0.0
        %1629 = vmatpush1.xpose.msra.mxu0 0.0
        %1630 = vmatprep.subr.mxu0 0.0
        %1631 = vmatpush1.xpose.msra.mxu0 0.0
        %1632 = vmatprep.subr.mxu0 0.0
        %1633 = vmatpush1.xpose.msra.mxu0 0.0
        %1634 = vmatprep.subr.mxu0 0.0
        %1635 = vmatpush1.xpose.msra.mxu0 0.0
        %1636 = vmatprep.subr.mxu0 0.0
        %1637 = vmatpush1.xpose.msra.mxu0 0.0
        %1638 = vmatprep.subr.mxu0 0.0
        %1639 = vmatpush1.xpose.msra.mxu0 0.0
        %1640 = vmatprep.subr.mxu0 0.0
        %1641 = vmatpush1.xpose.msra.mxu0 0.0
        %1642 = vmatprep.subr.mxu0 0.0
        %1643 = vmatpush1.xpose.msra.mxu0 %v1611
        %1644 = vmatprep.subr.mxu0 0.0
        %1645 = vmatpush2.xpose.msra.mxu0 0.0
        %1646 = vmatprep.subr.mxu0 0.0
        %1647 = vmatpush2.xpose.msra.mxu0 0.0
        %1648 = vmatprep.subr.mxu0 0.0
        %1649 = vmatpush2.xpose.msra.mxu0 0.0
        %1650 = vmatprep.subr.mxu0 0.0
        %1651 = vmatpush2.xpose.msra.mxu0 0.0
        %1652 = vmatprep.subr.mxu0 0.0
        %1653 = vmatpush2.xpose.msra.mxu0 0.0
        %1654 = vmatprep.subr.mxu0 0.0
        %1655 = vmatpush2.xpose.msra.mxu0 0.0
        %1656 = vmatprep.subr.mxu0 0.0
        %1657 = vmatpush2.xpose.msra.mxu0 0.0
        %1658 = vmatprep.subr.mxu0 0.0
        %1659 = vmatpush2.xpose.msra.mxu0 0.0
        %1660 = vmatprep.subr.mxu0 0.0
        %1661 = vmatpush2.xpose.msra.mxu0 0.0
        %1662 = vmatprep.subr.mxu0 0.0
        %1663 = vmatpush2.xpose.msra.mxu0 0.0
        %1664 = vmatprep.subr.mxu0 0.0
        %1665 = vmatpush2.xpose.msra.mxu0 0.0
        %1666 = vmatprep.subr.mxu0 0.0
        %1667 = vmatpush2.xpose.msra.mxu0 0.0
        %1668 = vmatprep.subr.mxu0 0.0
        %1669 = vmatpush2.xpose.msra.mxu0 0.0
        %1670 = vmatprep.subr.mxu0 0.0
        %1671 = vmatpush2.xpose.msra.mxu0 0.0
        %1672 = vmatprep.subr.mxu0 0.0
        %1673 = vmatpush2.xpose.msra.mxu0 0.0
        %1674 = vmatprep.subr.mxu0 0.0
        %1675 = vmatpush2.xpose.msra.mxu0 0.0
        %1676 = vmatprep.mubr.f32.mxu0 0.0
        %1677 = vmatmul.mubr.f32.gmra.mxu0 %v1532
        %v1678 = vpop.f32.mrf.mxu0
        %v1679 = vadd.f32 0.0, %v1678
        %v1680 = vpop.f32.mrf.mxu0
        %1681 = vmatprep.mubr.f32.mxu0 0.0
        %1682 = vmatmul.mubr.f32.gmra.mxu0 %v1533
        %v1683 = vpop.f32.mrf.mxu0
        %v1684 = vadd.f32 0.0, %v1683
        %v1685 = vpop.f32.mrf.mxu0
        %1686 = vdwg.mxu0
        %v1687 = vsel %vm658, %v1603, -inf
        %1688 = vmax.xlane.f32.xlu0 %v1687
        %v1689 = vpop.xlane.xlu0 %1688
        %v1690 = vsel %vm658, %v1608, -inf
        %1691 = vmax.xlane.f32.xlu0 %v1690
        %v1692 = vpop.xlane.xlu0 %1691
        %vm1693 = vcmask 64512
        %v1694 = vsel %vm1693, %v1679, -inf
        %1695 = vmax.xlane.f32.xlu0 %v1694
        %v1696 = vpop.xlane.xlu0 %1695
        %v1697 = vsel %vm1693, %v1684, -inf
        %1698 = vmax.xlane.f32.xlu0 %v1697
        %v1699 = vpop.xlane.xlu0 %1698
        %v1700 = vmax.f32 %v1689, %v1696
        %v1701 = vmax.f32 %v1692, %v1699
        %v1702 = vsub.f32 %v1603, %v1700
        %v1703 = vsub.f32 %v1608, %v1701
        %v1704 = vmul.f32 %v1702, 1.442695
        %v1705 = vpow.pop %v1704
        %v1706 = vmul.f32 %v1703, 1.442695
        %v1707 = vpow.pop %v1706
        %v1708 = vsub.f32 %v1679, %v1700
        %v1709 = vsub.f32 %v1684, %v1701
        %v1710 = vmul.f32 %v1708, 1.442695
        %v1711 = vpow.pop %v1710
        %v1712 = vmul.f32 %v1709, 1.442695
        %v1713 = vpow.pop %v1712
        %v1714 = vsel %vm658, %v1705, 0.0
        %1715 = vadd.xlane.f32.xlu0 %v1714
        %v1716 = vpop.xlane.xlu0 %1715
        %v1717 = vsel %vm658, %v1707, 0.0
        %1718 = vadd.xlane.f32.xlu0 %v1717
        %v1719 = vpop.xlane.xlu0 %1718
        %v1720 = vsel %vm1693, %v1711, 0.0
        %1721 = vadd.xlane.f32.xlu0 %v1720
        %v1722 = vpop.xlane.xlu0 %1721
        %v1723 = vsel %vm1693, %v1713, 0.0
        %1724 = vadd.xlane.f32.xlu0 %v1723
        %v1725 = vpop.xlane.xlu0 %1724
        %v1726 = vadd.f32 %v1716, %v1722
        %v1727 = vadd.f32 %v1719, %v1725
        %v1728 = vld [vmem:[#allocation4] sm:$0xff]
        %v1729 = vld [vmem:[#allocation4 + $0x8] sm:$0xff]
        %v1730 = vld [vmem:[#allocation6] sm:$0xff]
        %v1732 = vsel %vm1693, %v1711, 0
        %v1735 = vsel %vm1693, %v1713, 0
        %1737 = vmatprep.subr.mxu0 0.0
        %1738 = vmatpush1.msra.mxu0 0.0
        %1739 = vmatprep.subr.mxu0 0.0
        %1740 = vmatpush1.msra.mxu0 0.0
        %1741 = vmatprep.subr.mxu0 0.0
        %1742 = vmatpush1.msra.mxu0 0.0
        %1743 = vmatprep.subr.mxu0 0.0
        %1744 = vmatpush1.msra.mxu0 0.0
        %1745 = vmatprep.subr.mxu0 0.0
        %1746 = vmatpush1.msra.mxu0 0.0
        %1747 = vmatprep.subr.mxu0 0.0
        %1748 = vmatpush1.msra.mxu0 0.0
        %1749 = vmatprep.subr.mxu0 0.0
        %1750 = vmatpush1.msra.mxu0 0.0
        %1751 = vmatprep.subr.mxu0 0.0
        %1752 = vmatpush1.msra.mxu0 0.0
        %1753 = vmatprep.subr.mxu0 0.0
        %1754 = vmatpush1.msra.mxu0 0.0
        %1755 = vmatprep.subr.mxu0 0.0
        %1756 = vmatpush1.msra.mxu0 0.0
        %1757 = vmatprep.subr.mxu0 0.0
        %1758 = vmatpush1.msra.mxu0 0.0
        %1759 = vmatprep.subr.mxu0 0.0
        %1760 = vmatpush1.msra.mxu0 0.0
        %1761 = vmatprep.subr.mxu0 0.0
        %1762 = vmatpush1.msra.mxu0 0.0
        %1763 = vmatprep.subr.mxu0 0.0
        %1764 = vmatpush1.msra.mxu0 0.0
        %1765 = vmatprep.subr.mxu0 0.0
        %1766 = vmatpush1.msra.mxu0 0.0
        %1767 = vmatprep.subr.mxu0 0.0
        %1768 = vmatpush1.msra.mxu0 %v1730
        %1769 = vmatprep.subr.mxu0 0.0
        %1770 = vmatpush2.msra.mxu0 0.0
        %1771 = vmatprep.subr.mxu0 0.0
        %1772 = vmatpush2.msra.mxu0 0.0
        %1773 = vmatprep.subr.mxu0 0.0
        %1774 = vmatpush2.msra.mxu0 0.0
        %1775 = vmatprep.subr.mxu0 0.0
        %1776 = vmatpush2.msra.mxu0 0.0
        %1777 = vmatprep.subr.mxu0 0.0
        %1778 = vmatpush2.msra.mxu0 0.0
        %1779 = vmatprep.subr.mxu0 0.0
        %1780 = vmatpush2.msra.mxu0 0.0
        %1781 = vmatprep.subr.mxu0 0.0
        %1782 = vmatpush2.msra.mxu0 0.0
        %1783 = vmatprep.subr.mxu0 0.0
        %1784 = vmatpush2.msra.mxu0 0.0
        %1785 = vmatprep.subr.mxu0 0.0
        %1786 = vmatpush2.msra.mxu0 0.0
        %1787 = vmatprep.subr.mxu0 0.0
        %1788 = vmatpush2.msra.mxu0 0.0
        %1789 = vmatprep.subr.mxu0 0.0
        %1790 = vmatpush2.msra.mxu0 0.0
        %1791 = vmatprep.subr.mxu0 0.0
        %1792 = vmatpush2.msra.mxu0 0.0
        %1793 = vmatprep.subr.mxu0 0.0
        %1794 = vmatpush2.msra.mxu0 0.0
        %1795 = vmatprep.subr.mxu0 0.0
        %1796 = vmatpush2.msra.mxu0 0.0
        %1797 = vmatprep.subr.mxu0 0.0
        %1798 = vmatpush2.msra.mxu0 0.0
        %1799 = vmatprep.subr.mxu0 0.0
        %1800 = vmatpush2.msra.mxu0 0.0
        %1801 = vmatprep.mubr.f32.mxu0 0.0
        %1802 = vmatmul.mubr.f32.gmra.mxu0 %v1732
        %v1803 = vpop.f32.mrf.mxu0
        %v1804 = vadd.f32 0.0, %v1803
        %v1805 = vpop.f32.mrf.mxu0
        %1806 = vmatprep.mubr.f32.mxu0 0.0
        %1807 = vmatmul.mubr.f32.gmra.mxu0 %v1735
        %v1808 = vpop.f32.mrf.mxu0
        %v1809 = vadd.f32 0.0, %v1808
        %v1810 = vpop.f32.mrf.mxu0
        %1811 = vdwg.mxu0
        %v1813 = vsel %vm658, %v1705, 0
        %v1816 = vsel %vm658, %v1707, 0
        %1818 = vmatprep.subr.mxu0 0.0
        %1819 = vmatpush1.msra.mxu0 0.0
        %1820 = vmatprep.subr.mxu0 0.0
        %1821 = vmatpush1.msra.mxu0 0.0
        %1822 = vmatprep.subr.mxu0 0.0
        %1823 = vmatpush1.msra.mxu0 0.0
        %1824 = vmatprep.subr.mxu0 0.0
        %1825 = vmatpush1.msra.mxu0 0.0
        %1826 = vmatprep.subr.mxu0 0.0
        %1827 = vmatpush1.msra.mxu0 0.0
        %1828 = vmatprep.subr.mxu0 0.0
        %1829 = vmatpush1.msra.mxu0 0.0
        %1830 = vmatprep.subr.mxu0 0.0
        %1831 = vmatpush1.msra.mxu0 0.0
        %1832 = vmatprep.subr.mxu0 0.0
        %1833 = vmatpush1.msra.mxu0 0.0
        %1834 = vmatprep.subr.mxu0 0.0
        %1835 = vmatpush1.msra.mxu0 0.0
        %1836 = vmatprep.subr.mxu0 0.0
        %1837 = vmatpush1.msra.mxu0 0.0
        %1838 = vmatprep.subr.mxu0 0.0
        %1839 = vmatpush1.msra.mxu0 0.0
        %1840 = vmatprep.subr.mxu0 0.0
        %1841 = vmatpush1.msra.mxu0 0.0
        %1842 = vmatprep.subr.mxu0 0.0
        %1843 = vmatpush1.msra.mxu0 0.0
        %1844 = vmatprep.subr.mxu0 0.0
        %1845 = vmatpush1.msra.mxu0 0.0
        %1846 = vmatprep.subr.mxu0 0.0
        %1847 = vmatpush1.msra.mxu0 %v1729
        %1848 = vmatprep.subr.mxu0 0.0
        %1849 = vmatpush1.msra.mxu0 %v1728
        %1850 = vmatprep.subr.mxu0 0.0
        %1851 = vmatpush2.msra.mxu0 0.0
        %1852 = vmatprep.subr.mxu0 0.0
        %1853 = vmatpush2.msra.mxu0 0.0
        %1854 = vmatprep.subr.mxu0 0.0
        %1855 = vmatpush2.msra.mxu0 0.0
        %1856 = vmatprep.subr.mxu0 0.0
        %1857 = vmatpush2.msra.mxu0 0.0
        %1858 = vmatprep.subr.mxu0 0.0
        %1859 = vmatpush2.msra.mxu0 0.0
        %1860 = vmatprep.subr.mxu0 0.0
        %1861 = vmatpush2.msra.mxu0 0.0
        %1862 = vmatprep.subr.mxu0 0.0
        %1863 = vmatpush2.msra.mxu0 0.0
        %1864 = vmatprep.subr.mxu0 0.0
        %1865 = vmatpush2.msra.mxu0 0.0
        %1866 = vmatprep.subr.mxu0 0.0
        %1867 = vmatpush2.msra.mxu0 0.0
        %1868 = vmatprep.subr.mxu0 0.0
        %1869 = vmatpush2.msra.mxu0 0.0
        %1870 = vmatprep.subr.mxu0 0.0
        %1871 = vmatpush2.msra.mxu0 0.0
        %1872 = vmatprep.subr.mxu0 0.0
        %1873 = vmatpush2.msra.mxu0 0.0
        %1874 = vmatprep.subr.mxu0 0.0
        %1875 = vmatpush2.msra.mxu0 0.0
        %1876 = vmatprep.subr.mxu0 0.0
        %1877 = vmatpush2.msra.mxu0 0.0
        %1878 = vmatprep.subr.mxu0 0.0
        %1879 = vmatpush2.msra.mxu0 0.0
        %1880 = vmatprep.subr.mxu0 0.0
        %1881 = vmatpush2.msra.mxu0 0.0
        %1882 = vmatprep.mubr.f32.mxu0 0.0
        %1883 = vmatmul.mubr.f32.gmra.mxu0 %v1813
        %v1884 = vpop.f32.mrf.mxu0
        %v1885 = vadd.f32 %v1804, %v1884
        %v1886 = vpop.f32.mrf.mxu0
        %1887 = vmatprep.mubr.f32.mxu0 0.0
        %1888 = vmatmul.mubr.f32.gmra.mxu0 %v1816
        %v1889 = vpop.f32.mrf.mxu0
        %v1890 = vadd.f32 %v1809, %v1889
        %v1891 = vpop.f32.mrf.mxu0
        %1892 = vdwg.mxu0
        %v1893 = vrcp.pop %v1726
        %v1894 = vmul.f32 %v1885, %v1893
        %v1895 = vrcp.pop %v1727
        %v1896 = vmul.f32 %v1890, %v1895
        %1897 = vst [vmem:[#allocation7] sm:$0xff] %v1894
        %1898 = vst [vmem:[#allocation7 + $0x8] sm:$0xff] %v1896
        %v1899 = vld [vmem:[#allocation7] sm:$0xff]
        %v1900 = vld [vmem:[#allocation7 + $0x8] sm:$0xff]
        %v1901 = vld [vmem:[#allocation20] sm:$0xff]
        %v1902 = vld [vmem:[#allocation20 + $0x8] sm:$0xff]
        %v1903 = vld [vmem:[#allocation20 + $0x10] sm:$0xff]
        %v1904 = vld [vmem:[#allocation20 + $0x18] sm:$0xff]
        %v1905 = vld [vmem:[#allocation20 + $0x20] sm:$0xff]
        %v1906 = vld [vmem:[#allocation20 + $0x28] sm:$0xff]
        %v1907 = vld [vmem:[#allocation20 + $0x30] sm:$0xff]
        %v1908 = vld [vmem:[#allocation20 + $0x38] sm:$0xff]
        %v1909 = vld [vmem:[#allocation20 + $0x40] sm:$0xff]
        %v1910 = vld [vmem:[#allocation20 + $0x48] sm:$0xff]
        %v1911 = vld [vmem:[#allocation20 + $0x50] sm:$0xff]
        %v1912 = vld [vmem:[#allocation20 + $0x58] sm:$0xff]
        %v1913 = vld [vmem:[#allocation20 + $0x60] sm:$0xff]
        %v1914 = vld [vmem:[#allocation20 + $0x68] sm:$0xff]
        %v1915 = vld [vmem:[#allocation20 + $0x70] sm:$0xff]
        %v1916 = vld [vmem:[#allocation20 + $0x78] sm:$0xff]
        %v1917 = vlaneseq
        %v1918 = vshrl.u32 %v1917, 7
        %v1919 = vsub.s32 0, %v1918
        %v1920 = vrot.slane %v555, %v1919
        %1921 = vmatprep.subr.mxu0 0.0
        %1922 = vmatpush1.msra.mxu0 %v1916
        %1923 = vmatprep.subr.mxu0 0.0
        %1924 = vmatpush1.msra.mxu0 %v1915
        %1925 = vmatprep.subr.mxu0 0.0
        %1926 = vmatpush1.msra.mxu0 %v1914
        %1927 = vmatprep.subr.mxu0 0.0
        %1928 = vmatpush1.msra.mxu0 %v1913
        %1929 = vmatprep.subr.mxu0 0.0
        %1930 = vmatpush1.msra.mxu0 %v1912
        %1931 = vmatprep.subr.mxu0 0.0
        %1932 = vmatpush1.msra.mxu0 %v1911
        %1933 = vmatprep.subr.mxu0 0.0
        %1934 = vmatpush1.msra.mxu0 %v1910
        %1935 = vmatprep.subr.mxu0 0.0
        %1936 = vmatpush1.msra.mxu0 %v1909
        %1937 = vmatprep.subr.mxu0 0.0
        %1938 = vmatpush1.msra.mxu0 %v1908
        %1939 = vmatprep.subr.mxu0 0.0
        %1940 = vmatpush1.msra.mxu0 %v1907
        %1941 = vmatprep.subr.mxu0 0.0
        %1942 = vmatpush1.msra.mxu0 %v1906
        %1943 = vmatprep.subr.mxu0 0.0
        %1944 = vmatpush1.msra.mxu0 %v1905
        %1945 = vmatprep.subr.mxu0 0.0
        %1946 = vmatpush1.msra.mxu0 %v1904
        %1947 = vmatprep.subr.mxu0 0.0
        %1948 = vmatpush1.msra.mxu0 %v1903
        %1949 = vmatprep.subr.mxu0 0.0
        %1950 = vmatpush1.msra.mxu0 %v1902
        %1951 = vmatprep.subr.mxu0 0.0
        %1952 = vmatpush1.msra.mxu0 %v1901
        %1953 = vmatprep.subr.mxu0 0.0
        %1954 = vmatpush2.msra.mxu0 0.0
        %1955 = vmatprep.subr.mxu0 0.0
        %1956 = vmatpush2.msra.mxu0 0.0
        %1957 = vmatprep.subr.mxu0 0.0
        %1958 = vmatpush2.msra.mxu0 0.0
        %1959 = vmatprep.subr.mxu0 0.0
        %1960 = vmatpush2.msra.mxu0 0.0
        %1961 = vmatprep.subr.mxu0 0.0
        %1962 = vmatpush2.msra.mxu0 0.0
        %1963 = vmatprep.subr.mxu0 0.0
        %1964 = vmatpush2.msra.mxu0 0.0
        %1965 = vmatprep.subr.mxu0 0.0
        %1966 = vmatpush2.msra.mxu0 0.0
        %1967 = vmatprep.subr.mxu0 0.0
        %1968 = vmatpush2.msra.mxu0 0.0
        %1969 = vmatprep.subr.mxu0 0.0
        %1970 = vmatpush2.msra.mxu0 0.0
        %1971 = vmatprep.subr.mxu0 0.0
        %1972 = vmatpush2.msra.mxu0 0.0
        %1973 = vmatprep.subr.mxu0 0.0
        %1974 = vmatpush2.msra.mxu0 0.0
        %1975 = vmatprep.subr.mxu0 0.0
        %1976 = vmatpush2.msra.mxu0 0.0
        %1977 = vmatprep.subr.mxu0 0.0
        %1978 = vmatpush2.msra.mxu0 0.0
        %1979 = vmatprep.subr.mxu0 0.0
        %1980 = vmatpush2.msra.mxu0 0.0
        %1981 = vmatprep.subr.mxu0 0.0
        %1982 = vmatpush2.msra.mxu0 0.0
        %1983 = vmatprep.subr.mxu0 0.0
        %1984 = vmatpush2.msra.mxu0 0.0
        %1985 = vmatprep.mubr.f32.mxu0 0.0
        %1986 = vmatmul.mubr.f32.gmra.mxu0 %v1899
        %v1987 = vpop.f32.mrf.mxu0
        %v1988 = vadd.f32 %v1920, %v1987
        %v1989 = vpop.f32.mrf.mxu0
        %1990 = vmatprep.mubr.f32.mxu0 0.0
        %1991 = vmatmul.mubr.f32.gmra.mxu0 %v1900
        %v1992 = vpop.f32.mrf.mxu0
        %v1993 = vadd.f32 %v1920, %v1992
        %v1994 = vpop.f32.mrf.mxu0
        %1995 = vdwg.mxu0
        %1996 = vmatprep.subr.mxu0 0.0
        %1997 = vmatpush1.msra.mxu0 0.0
        %1998 = vmatprep.subr.mxu0 0.0
        %1999 = vmatpush1.msra.mxu0 0.0
        %2000 = vmatprep.subr.mxu0 0.0
        %2001 = vmatpush1.msra.mxu0 0.0
        %2002 = vmatprep.subr.mxu0 0.0
        %2003 = vmatpush1.msra.mxu0 0.0
        %2004 = vmatprep.subr.mxu0 0.0
        %2005 = vmatpush1.msra.mxu0 0.0
        %2006 = vmatprep.subr.mxu0 0.0
        %2007 = vmatpush1.msra.mxu0 0.0
        %2008 = vmatprep.subr.mxu0 0.0
        %2009 = vmatpush1.msra.mxu0 0.0
        %2010 = vmatprep.subr.mxu0 0.0
        %2011 = vmatpush1.msra.mxu0 0.0
        %2012 = vmatprep.subr.mxu0 0.0
        %2013 = vmatpush1.msra.mxu0 0.0
        %2014 = vmatprep.subr.mxu0 0.0
        %2015 = vmatpush1.msra.mxu0 0.0
        %2016 = vmatprep.subr.mxu0 0.0
        %2017 = vmatpush1.msra.mxu0 0.0
        %2018 = vmatprep.subr.mxu0 0.0
        %2019 = vmatpush1.msra.mxu0 0.0
        %2020 = vmatprep.subr.mxu0 0.0
        %2021 = vmatpush1.msra.mxu0 0.0
        %2022 = vmatprep.subr.mxu0 0.0
        %2023 = vmatpush1.msra.mxu0 0.0
        %2024 = vmatprep.subr.mxu0 0.0
        %2025 = vmatpush1.msra.mxu0 %v1993
        %2026 = vmatprep.subr.mxu0 0.0
        %2027 = vmatpush1.msra.mxu0 %v1988
        %2028 = vmatprep.subr.mxu0 0.0
        %2029 = vmatpush2.msra.mxu0 0.0
        %2030 = vmatprep.subr.mxu0 0.0
        %2031 = vmatpush2.msra.mxu0 0.0
        %2032 = vmatprep.subr.mxu0 0.0
        %2033 = vmatpush2.msra.mxu0 0.0
        %2034 = vmatprep.subr.mxu0 0.0
        %2035 = vmatpush2.msra.mxu0 0.0
        %2036 = vmatprep.subr.mxu0 0.0
        %2037 = vmatpush2.msra.mxu0 0.0
        %2038 = vmatprep.subr.mxu0 0.0
        %2039 = vmatpush2.msra.mxu0 0.0
        %2040 = vmatprep.subr.mxu0 0.0
        %2041 = vmatpush2.msra.mxu0 0.0
        %2042 = vmatprep.subr.mxu0 0.0
        %2043 = vmatpush2.msra.mxu0 0.0
        %2044 = vmatprep.subr.mxu0 0.0
        %2045 = vmatpush2.msra.mxu0 0.0
        %2046 = vmatprep.subr.mxu0 0.0
        %2047 = vmatpush2.msra.mxu0 0.0
        %2048 = vmatprep.subr.mxu0 0.0
        %2049 = vmatpush2.msra.mxu0 0.0
        %2050 = vmatprep.subr.mxu0 0.0
        %2051 = vmatpush2.msra.mxu0 0.0
        %2052 = vmatprep.subr.mxu0 0.0
        %2053 = vmatpush2.msra.mxu0 0.0
        %2054 = vmatprep.subr.mxu0 0.0
        %2055 = vmatpush2.msra.mxu0 0.0
        %2056 = vmatprep.subr.mxu0 0.0
        %2057 = vmatpush2.msra.mxu0 0.0
        %2058 = vmatprep.subr.mxu0 0.0
        %2059 = vmatpush2.msra.mxu0 0.0
        %2060 = vmatprep.mubr.f32.mxu0 0.0
        %2061 = vmatmul.mubr.f32.gmra.mxu0 %v660
        %v2062 = vpop.f32.mrf.mxu0
        %v2063 = vadd.f32 0.0, %v2062
        %v2064 = vpop.f32.mrf.mxu0
        %2065 = vdwg.mxu0
        %v2067 = vsel %vm739, %v2063, 0
        %2069 = vmatprep.subr.mxu0 0.0
        %2070 = vmatpush1.msra.mxu0 0.0
        %2071 = vmatprep.subr.mxu0 0.0
        %2072 = vmatpush1.msra.mxu0 0.0
        %2073 = vmatprep.subr.mxu0 0.0
        %2074 = vmatpush1.msra.mxu0 0.0
        %2075 = vmatprep.subr.mxu0 0.0
        %2076 = vmatpush1.msra.mxu0 0.0
        %2077 = vmatprep.subr.mxu0 0.0
        %2078 = vmatpush1.msra.mxu0 0.0
        %2079 = vmatprep.subr.mxu0 0.0
        %2080 = vmatpush1.msra.mxu0 0.0
        %2081 = vmatprep.subr.mxu0 0.0
        %2082 = vmatpush1.msra.mxu0 0.0
        %2083 = vmatprep.subr.mxu0 0.0
        %2084 = vmatpush1.msra.mxu0 0.0
        %2085 = vmatprep.subr.mxu0 0.0
        %2086 = vmatpush1.msra.mxu0 0.0
        %2087 = vmatprep.subr.mxu0 0.0
        %2088 = vmatpush1.msra.mxu0 0.0
        %2089 = vmatprep.subr.mxu0 0.0
        %2090 = vmatpush1.msra.mxu0 0.0
        %2091 = vmatprep.subr.mxu0 0.0
        %2092 = vmatpush1.msra.mxu0 0.0
        %2093 = vmatprep.subr.mxu0 0.0
        %2094 = vmatpush1.msra.mxu0 0.0
        %2095 = vmatprep.subr.mxu0 0.0
        %2096 = vmatpush1.msra.mxu0 0.0
        %2097 = vmatprep.subr.mxu0 0.0
        %2098 = vmatpush1.msra.mxu0 0.0
        %2099 = vmatprep.subr.mxu0 0.0
        %2100 = vmatpush1.msra.mxu0 %v2067
        %2101 = vmatprep.subr.mxu0 0.0
        %2102 = vmatpush2.msra.mxu0 0.0
        %2103 = vmatprep.subr.mxu0 0.0
        %2104 = vmatpush2.msra.mxu0 0.0
        %2105 = vmatprep.subr.mxu0 0.0
        %2106 = vmatpush2.msra.mxu0 0.0
        %2107 = vmatprep.subr.mxu0 0.0
        %2108 = vmatpush2.msra.mxu0 0.0
        %2109 = vmatprep.subr.mxu0 0.0
        %2110 = vmatpush2.msra.mxu0 0.0
        %2111 = vmatprep.subr.mxu0 0.0
        %2112 = vmatpush2.msra.mxu0 0.0
        %2113 = vmatprep.subr.mxu0 0.0
        %2114 = vmatpush2.msra.mxu0 0.0
        %2115 = vmatprep.subr.mxu0 0.0
        %2116 = vmatpush2.msra.mxu0 0.0
        %2117 = vmatprep.subr.mxu0 0.0
        %2118 = vmatpush2.msra.mxu0 0.0
        %2119 = vmatprep.subr.mxu0 0.0
        %2120 = vmatpush2.msra.mxu0 0.0
        %2121 = vmatprep.subr.mxu0 0.0
        %2122 = vmatpush2.msra.mxu0 0.0
        %2123 = vmatprep.subr.mxu0 0.0
        %2124 = vmatpush2.msra.mxu0 0.0
        %2125 = vmatprep.subr.mxu0 0.0
        %2126 = vmatpush2.msra.mxu0 0.0
        %2127 = vmatprep.subr.mxu0 0.0
        %2128 = vmatpush2.msra.mxu0 0.0
        %2129 = vmatprep.subr.mxu0 0.0
        %2130 = vmatpush2.msra.mxu0 0.0
        %2131 = vmatprep.subr.mxu0 0.0
        %2132 = vmatpush2.msra.mxu0 0.0
        %2133 = vmatprep.mubr.f32.mxu0 0.0
        %2134 = vmatmul.mubr.f32.gmra.mxu0 %v734
        %v2135 = vpop.f32.mrf.mxu0
        %v2136 = vadd.f32 0.0, %v2135
        %v2137 = vpop.f32.mrf.mxu0
        %2138 = vmatprep.mubr.f32.mxu0 0.0
        %2139 = vmatmul.mubr.f32.gmra.mxu0 %v737
        %v2140 = vpop.f32.mrf.mxu0
        %v2141 = vadd.f32 0.0, %v2140
        %v2142 = vpop.f32.mrf.mxu0
        %2143 = vdwg.mxu0
        %v2144 = vsub.f32 %v1988, %v2136
        %v2145 = vsub.f32 %v1993, %v2141
        %v2146 = vmul.f32 %v2144, %v2144
        %v2147 = vmul.f32 %v2145, %v2145
        %2148 = vmatprep.subr.mxu0 0.0
        %2149 = vmatpush1.msra.mxu0 0.0
        %2150 = vmatprep.subr.mxu0 0.0
        %2151 = vmatpush1.msra.mxu0 0.0
        %2152 = vmatprep.subr.mxu0 0.0
        %2153 = vmatpush1.msra.mxu0 0.0
        %2154 = vmatprep.subr.mxu0 0.0
        %2155 = vmatpush1.msra.mxu0 0.0
        %2156 = vmatprep.subr.mxu0 0.0
        %2157 = vmatpush1.msra.mxu0 0.0
        %2158 = vmatprep.subr.mxu0 0.0
        %2159 = vmatpush1.msra.mxu0 0.0
        %2160 = vmatprep.subr.mxu0 0.0
        %2161 = vmatpush1.msra.mxu0 0.0
        %2162 = vmatprep.subr.mxu0 0.0
        %2163 = vmatpush1.msra.mxu0 0.0
        %2164 = vmatprep.subr.mxu0 0.0
        %2165 = vmatpush1.msra.mxu0 0.0
        %2166 = vmatprep.subr.mxu0 0.0
        %2167 = vmatpush1.msra.mxu0 0.0
        %2168 = vmatprep.subr.mxu0 0.0
        %2169 = vmatpush1.msra.mxu0 0.0
        %2170 = vmatprep.subr.mxu0 0.0
        %2171 = vmatpush1.msra.mxu0 0.0
        %2172 = vmatprep.subr.mxu0 0.0
        %2173 = vmatpush1.msra.mxu0 0.0
        %2174 = vmatprep.subr.mxu0 0.0
        %2175 = vmatpush1.msra.mxu0 0.0
        %2176 = vmatprep.subr.mxu0 0.0
        %2177 = vmatpush1.msra.mxu0 %v2147
        %2178 = vmatprep.subr.mxu0 0.0
        %2179 = vmatpush1.msra.mxu0 %v2146
        %2180 = vmatprep.subr.mxu0 0.0
        %2181 = vmatpush2.msra.mxu0 0.0
        %2182 = vmatprep.subr.mxu0 0.0
        %2183 = vmatpush2.msra.mxu0 0.0
        %2184 = vmatprep.subr.mxu0 0.0
        %2185 = vmatpush2.msra.mxu0 0.0
        %2186 = vmatprep.subr.mxu0 0.0
        %2187 = vmatpush2.msra.mxu0 0.0
        %2188 = vmatprep.subr.mxu0 0.0
        %2189 = vmatpush2.msra.mxu0 0.0
        %2190 = vmatprep.subr.mxu0 0.0
        %2191 = vmatpush2.msra.mxu0 0.0
        %2192 = vmatprep.subr.mxu0 0.0
        %2193 = vmatpush2.msra.mxu0 0.0
        %2194 = vmatprep.subr.mxu0 0.0
        %2195 = vmatpush2.msra.mxu0 0.0
        %2196 = vmatprep.subr.mxu0 0.0
        %2197 = vmatpush2.msra.mxu0 0.0
        %2198 = vmatprep.subr.mxu0 0.0
        %2199 = vmatpush2.msra.mxu0 0.0
        %2200 = vmatprep.subr.mxu0 0.0
        %2201 = vmatpush2.msra.mxu0 0.0
        %2202 = vmatprep.subr.mxu0 0.0
        %2203 = vmatpush2.msra.mxu0 0.0
        %2204 = vmatprep.subr.mxu0 0.0
        %2205 = vmatpush2.msra.mxu0 0.0
        %2206 = vmatprep.subr.mxu0 0.0
        %2207 = vmatpush2.msra.mxu0 0.0
        %2208 = vmatprep.subr.mxu0 0.0
        %2209 = vmatpush2.msra.mxu0 0.0
        %2210 = vmatprep.subr.mxu0 0.0
        %2211 = vmatpush2.msra.mxu0 0.0
        %2212 = vmatprep.mubr.f32.mxu0 0.0
        %2213 = vmatmul.mubr.f32.gmra.mxu0 %v660
        %v2214 = vpop.f32.mrf.mxu0
        %v2215 = vadd.f32 0.0, %v2214
        %v2216 = vpop.f32.mrf.mxu0
        %2217 = vdwg.mxu0
        %v2219 = vsel %vm739, %v2215, 0
        %2221 = vmatprep.subr.mxu0 0.0
        %2222 = vmatpush1.msra.mxu0 0.0
        %2223 = vmatprep.subr.mxu0 0.0
        %2224 = vmatpush1.msra.mxu0 0.0
        %2225 = vmatprep.subr.mxu0 0.0
        %2226 = vmatpush1.msra.mxu0 0.0
        %2227 = vmatprep.subr.mxu0 0.0
        %2228 = vmatpush1.msra.mxu0 0.0
        %2229 = vmatprep.subr.mxu0 0.0
        %2230 = vmatpush1.msra.mxu0 0.0
        %2231 = vmatprep.subr.mxu0 0.0
        %2232 = vmatpush1.msra.mxu0 0.0
        %2233 = vmatprep.subr.mxu0 0.0
        %2234 = vmatpush1.msra.mxu0 0.0
        %2235 = vmatprep.subr.mxu0 0.0
        %2236 = vmatpush1.msra.mxu0 0.0
        %2237 = vmatprep.subr.mxu0 0.0
        %2238 = vmatpush1.msra.mxu0 0.0
        %2239 = vmatprep.subr.mxu0 0.0
        %2240 = vmatpush1.msra.mxu0 0.0
        %2241 = vmatprep.subr.mxu0 0.0
        %2242 = vmatpush1.msra.mxu0 0.0
        %2243 = vmatprep.subr.mxu0 0.0
        %2244 = vmatpush1.msra.mxu0 0.0
        %2245 = vmatprep.subr.mxu0 0.0
        %2246 = vmatpush1.msra.mxu0 0.0
        %2247 = vmatprep.subr.mxu0 0.0
        %2248 = vmatpush1.msra.mxu0 0.0
        %2249 = vmatprep.subr.mxu0 0.0
        %2250 = vmatpush1.msra.mxu0 0.0
        %2251 = vmatprep.subr.mxu0 0.0
        %2252 = vmatpush1.msra.mxu0 %v2219
        %2253 = vmatprep.subr.mxu0 0.0
        %2254 = vmatpush2.msra.mxu0 0.0
        %2255 = vmatprep.subr.mxu0 0.0
        %2256 = vmatpush2.msra.mxu0 0.0
        %2257 = vmatprep.subr.mxu0 0.0
        %2258 = vmatpush2.msra.mxu0 0.0
        %2259 = vmatprep.subr.mxu0 0.0
        %2260 = vmatpush2.msra.mxu0 0.0
        %2261 = vmatprep.subr.mxu0 0.0
        %2262 = vmatpush2.msra.mxu0 0.0
        %2263 = vmatprep.subr.mxu0 0.0
        %2264 = vmatpush2.msra.mxu0 0.0
        %2265 = vmatprep.subr.mxu0 0.0
        %2266 = vmatpush2.msra.mxu0 0.0
        %2267 = vmatprep.subr.mxu0 0.0
        %2268 = vmatpush2.msra.mxu0 0.0
        %2269 = vmatprep.subr.mxu0 0.0
        %2270 = vmatpush2.msra.mxu0 0.0
        %2271 = vmatprep.subr.mxu0 0.0
        %2272 = vmatpush2.msra.mxu0 0.0
        %2273 = vmatprep.subr.mxu0 0.0
        %2274 = vmatpush2.msra.mxu0 0.0
        %2275 = vmatprep.subr.mxu0 0.0
        %2276 = vmatpush2.msra.mxu0 0.0
        %2277 = vmatprep.subr.mxu0 0.0
        %2278 = vmatpush2.msra.mxu0 0.0
        %2279 = vmatprep.subr.mxu0 0.0
        %2280 = vmatpush2.msra.mxu0 0.0
        %2281 = vmatprep.subr.mxu0 0.0
        %2282 = vmatpush2.msra.mxu0 0.0
        %2283 = vmatprep.subr.mxu0 0.0
        %2284 = vmatpush2.msra.mxu0 0.0
        %2285 = vmatprep.mubr.f32.mxu0 0.0
        %2286 = vmatmul.mubr.f32.gmra.mxu0 %v734
        %v2287 = vpop.f32.mrf.mxu0
        %v2288 = vadd.f32 1e-05, %v2287
        %v2289 = vpop.f32.mrf.mxu0
        %2290 = vmatprep.mubr.f32.mxu0 0.0
        %2291 = vmatmul.mubr.f32.gmra.mxu0 %v737
        %v2292 = vpop.f32.mrf.mxu0
        %v2293 = vadd.f32 1e-05, %v2292
        %v2294 = vpop.f32.mrf.mxu0
        %2295 = vdwg.mxu0
        %v2296 = vrsqrt.pop %v2288
        %v2297 = vrsqrt.pop %v2293
        %v2298 = vmul.f32 %v2144, %v2296
        %v2299 = vmul.f32 %v2145, %v2297
        %v2300 = vlaneseq
        %v2301 = vshrl.u32 %v2300, 7
        %v2302 = vsub.s32 0, %v2301
        %v2303 = vrot.slane %v556, %v2302
        %v2304 = vmul.f32 %v2298, %v2303
        %v2305 = vmul.f32 %v2299, %v2303
        %v2306 = vlaneseq
        %v2307 = vshrl.u32 %v2306, 7
        %v2308 = vsub.s32 0, %v2307
        %v2309 = vrot.slane %v557, %v2308
        %v2310 = vadd.f32 %v2304, %v2309
        %v2311 = vadd.f32 %v2305, %v2309
        %2312 = vst [vmem:[%s544] sm:$0xff] %v2310
        %2313 = vst [vmem:[%s544 + $0x8] sm:$0xff] %v2311
        %s2314 = sand.u32 %s303, 1
        %s2315 = scalar_lea.sflag [#allocation10], %s2314
        %s2316 = sand.u32 %s303, 1
        %s2317 = smul.addr %s2316, 16
        %s2318 = scalar_lea.vmem [#allocation22], %s2317
        // Predicated region
        $region101: #{tpu_custom_call.1} parent=67 // pred_check
          %p2319 = pneg %p313
        $region102: #{tpu_custom_call.1} parent=67 // pred_check_branch
          %2321 = sbr.rel (%p2319) target = $region104
        $region103: #{tpu_custom_call.1} parent=67 // pred_region
          %s2322 = smul.u32 2, %s33
          %s2324 = ssub.s32 256, 256
          %2325 = vsyncadd %s2315, %s2324
          %s2326 = smul.addr %s2322, 128
          %s2327 = scalar_lea.hbm %s12, %s2326
          %s2328 = sshll.u32 %s2318, 4
          %s2329 = int_to_ptr.vmem [resolvable:$true] %s2328
          %2334 = dma.vmem_to_hbm [thread:$0]  %s2329, 256, %s2327, %s2315, 128, 128, 8
        $region104: #{tpu_custom_call.1} parent=67 // pred_fallthru
          _
      $region68: #{tpu_custom_call.1} parent=5 // pred_fallthru
        _
      %p2335 = scmp.le.s32.totalorder 2, %s28
      // Predicated region
      $region105: #{tpu_custom_call.1} parent=5 // pred_check
        %p2336 = pneg %p2335
      $region106: #{tpu_custom_call.1} parent=5 // pred_check_branch
        %2338 = sbr.rel (%p2336) target = $region108
      $region107: #{tpu_custom_call.1} parent=5 // pred_region
        %s2339 = ssub.s32 %s28, 2
        // Predicated region
        $region109: #{tpu_custom_call.1} parent=107 // pred_check
          %p2340 = pneg %p319
        $region110: #{tpu_custom_call.1} parent=107 // pred_check_branch
          %2342 = sbr.rel (%p2340) target = $region112
        $region111: #{tpu_custom_call.1} parent=107 // pred_region
          %s2343 = sand.u32 %s304, 1
          %s2344 = scalar_lea.sflag [#allocation10], %s2343
          %s2345 = sand.u32 %s304, 1
          %s2346 = smul.addr %s2345, 16
          %s2347 = scalar_lea.vmem [#allocation22], %s2346
          %2348 = dma.done %s2344, 256
        $region112: #{tpu_custom_call.1} parent=107 // pred_fallthru
          _
      $region108: #{tpu_custom_call.1} parent=5 // pred_fallthru
        _
    $region6: #{tpu_custom_call.1} parent=1 // loop_footer
      %s32 = sadd.s32 1, %s28
    $region7: #{tpu_custom_call.1} parent=1 // loop_footer_branch
      %27 = sbr.rel target = $region3
    $region8: #{tpu_custom_call.1} parent=1 // loop_exit
      _
    %2349 = vsyncpa [#allocation9], 1
    %s2350 = scalar_lea.sflag [#allocation9], 1
    %2351 = vsyncpa %s2350, 1
    %2352 = vsyncpa [#allocation12], 1
    %2353 = vsyncpa [#allocation15], 1
    %2354 = vsyncpa [#allocation18], 1
    %2355 = vsyncpa [#allocation21], 1
    %2356 = vsyncpa [#allocation10], 1
    %s2357 = scalar_lea.sflag [#allocation10], 1
    %2358 = vsyncpa %s2357, 1

</llo_original>
